<compile_context>
chip_gen: v7x
topology: tpu7x:2x2x1
jax: 0.10.0
libtpu: 0.0.40
codegen_flags: <defaults>
</compile_context>

<pallas_src>
import jax
import jax.numpy as jnp
from jax.experimental import pallas as pl
from jax.experimental.pallas import tpu as pltpu


# ----------------------------------------------------------------------------
# Pallas kernel: fused Linear + bias + ReLU, tiled over the output dimension
# ----------------------------------------------------------------------------
def _linear_relu_kernel(x_ref, w_ref, b_ref, o_ref):
    # x_ref: (B_pad, K) bf16   w_ref: (K, TILE_E) bf16
    # b_ref: (1, TILE_E) f32   o_ref: (B_pad, TILE_E) f32
    acc = jnp.dot(x_ref[...], w_ref[...], preferred_element_type=jnp.float32)
    o_ref[...] = jnp.maximum(acc + b_ref[...], 0.0).astype(o_ref.dtype)


def _round_up(v, m):
    return ((v + m - 1) // m) * m


def _choose_e_tiling(e):
    """Pick (tile_e, e_pad): tile_e is a multiple of 128, e_pad = n_tiles*tile_e.

    Target ~1024-wide tiles (amortizes per-step overhead, ~4.7 MB bf16 W tile,
    ~9.4 MB double-buffered -> well under every generation's scoped VMEM).
    When e_pad >= 256 force at least 2 tiles so the "parallel" E axis can be
    sharded across v7x's two TensorCores.
    """
    e128 = _round_up(e, 128)
    n_tiles = max(1, -(-e128 // 1024))
    if n_tiles == 1 and e128 >= 256:
        n_tiles = 2
    tile_e = _round_up(-(-e128 // n_tiles), 128)
    return tile_e, n_tiles * tile_e


def linear_relu_padded(x, w_pad_bf16, b2d_pad, tile_e, out_e):
    """out = relu(x @ W + b), W/bias already padded to E_pad = n_tiles*tile_e.

    x:          (B, K)       float32
    w_pad_bf16: (K, E_pad)   bfloat16 (pre-transposed, pre-padded at init)
    b2d_pad:    (1, E_pad)   float32  (pre-padded at init)
    returns     (B, out_e)   float32
    """
    B, K = x.shape
    E_pad = w_pad_bf16.shape[1]

    # bf16 activations: cast once here (not per E tile inside the kernel);
    # pad B to a multiple of 16 for bf16 sublane packing. Padded rows are
    # sliced off before returning.
    B_pad = _round_up(max(B, 16), 16)
    x_bf16 = x.astype(jnp.bfloat16)
    x_p = x_bf16 if B_pad == B else jnp.pad(x_bf16, ((0, B_pad - B), (0, 0)))

    grid = (E_pad // tile_e,)

    cost = pl.CostEstimate(
        flops=2 * B_pad * K * E_pad,
        transcendentals=0,
        bytes_accessed=(K * E_pad * 2          # bf16 weight (dominant)
                        + B_pad * K * 2        # bf16 activations (once)
                        + B_pad * E_pad * 4    # f32 output
                        + E_pad * 4),          # f32 bias
    )

    out_padded = pl.pallas_call(
        _linear_relu_kernel,
        out_shape=jax.ShapeDtypeStruct((B_pad, E_pad), jnp.float32),
        grid_spec=pltpu.PrefetchScalarGridSpec(
            num_scalar_prefetch=0,
            grid=grid,
            in_specs=[
                pl.BlockSpec((B_pad, K), lambda j: (0, 0)),      # x resident
                pl.BlockSpec((K, tile_e), lambda j: (0, j)),     # W streamed
                pl.BlockSpec((1, tile_e), lambda j: (0, j)),     # bias tile
            ],
            out_specs=pl.BlockSpec((B_pad, tile_e), lambda j: (0, j)),
        ),
        compiler_params=pltpu.CompilerParams(
            dimension_semantics=("parallel",),   # E tiles independent (v7x 2-TC)
            vmem_limit_bytes=32 * 1024 * 1024,   # safe on v5e/v6e/v7x
        ),
        cost_estimate=cost,
    )(x_p, w_pad_bf16, b2d_pad)

    return out_padded[:B, :out_e]


# ----------------------------------------------------------------------------
# Module wrapper (parameters initialized deterministically in-script)
# ----------------------------------------------------------------------------
class SkipthoughtsEmbeddingPallas:
    SEQ2VEC_DIM = 2400  # fixed by the PyTorch module (in_features=2400)

    def __init__(self, vocab_size, embed_dim, out_dropout=-1, key=None):
        if key is None:
            key = jax.random.PRNGKey(0)
        k1, k2, k3 = jax.random.split(key, 3)
        self.dropout = out_dropout
        self.vocab_size = vocab_size
        self.embed_dim = embed_dim

        # TODO(synk): the real seq2vec is a pretrained skipthoughts GRU; we use
        # a deterministic embedding-table + masked mean-pool surrogate producing
        # 2400-d vectors.
        self.embed_table = (
            jax.random.normal(k1, (vocab_size, self.SEQ2VEC_DIM), jnp.float32) * 0.02
        )

        # nn.Linear(2400, embed_dim): weight (embed_dim, 2400), bias (embed_dim,)
        bound = 1.0 / jnp.sqrt(jnp.float32(self.SEQ2VEC_DIM))
        w = jax.random.uniform(
            k2, (embed_dim, self.SEQ2VEC_DIM), jnp.float32, -bound, bound
        )
        b = jax.random.uniform(k3, (embed_dim,), jnp.float32, -bound, bound)

        # Pre-transpose, pre-pad, and store W in bf16 ONCE at init (the kernel
        # is W-bytes/HBM-bandwidth bound; bf16 halves traffic, f32 MXU acc).
        # TODO(synk): on v7x an fp8 weight-storage path would halve W traffic
        # again; kept bf16 here so the same script runs on v5e/v6e.
        self.tile_e, e_pad = _choose_e_tiling(embed_dim)
        w_t = jnp.transpose(w).astype(jnp.bfloat16)          # (2400, E)
        if e_pad != embed_dim:
            w_t = jnp.pad(w_t, ((0, 0), (0, e_pad - embed_dim)))
            b = jnp.pad(b, (0, e_pad - embed_dim))
        self.w_t_pad = w_t                                    # (2400, E_pad) bf16
        self.b2d_pad = b.reshape(1, e_pad)                    # (1, E_pad)   f32

    def seq2vec(self, input_text):
        # input_text: (B, S) int32 token ids; 0 = pad.
        # Masked mean pool WITHOUT materializing a (B, S, 2400) intermediate:
        # scatter token counts into a (B, vocab) bag, then one matmul against
        # the embedding table (reads the table once per call).
        B, S = input_text.shape
        mask = (input_text > 0).astype(jnp.float32)                     # (B, S)
        counts = jnp.zeros((B, self.vocab_size), jnp.float32)
        counts = counts.at[jnp.arange(B)[:, None], input_text].add(mask)  # (B, V)
        denom = jnp.maximum(mask.sum(axis=1, keepdims=True), 1.0)       # (B, 1)
        return jnp.dot(counts, self.embed_table) / denom                # (B, 2400)

    def __call__(self, input_text):
        x_t_vec = self.seq2vec(input_text)                    # glue (plain JAX)
        out = linear_relu_padded(                             # Pallas hot path
            x_t_vec, self.w_t_pad, self.b2d_pad, self.tile_e, self.embed_dim
        )
        # dropout < 0 by default -> skipped, matching the PyTorch module
        # TODO(synk): stochastic dropout (if out_dropout >= 0) not implemented.
        return out


# ----------------------------------------------------------------------------
# Demo
# ----------------------------------------------------------------------------
if __name__ == "__main__":
    key = jax.random.PRNGKey(0)
    batch, seq_len, vocab_size, embed_dim = 2, 8, 50, 32

    module = SkipthoughtsEmbeddingPallas(
        vocab_size=vocab_size, embed_dim=embed_dim, out_dropout=-1, key=key
    )

    input_text = jax.random.randint(
        jax.random.PRNGKey(1), (batch, seq_len), minval=1, maxval=vocab_size,
        dtype=jnp.int32,
    )

    out = module(input_text)
    out = jax.block_until_ready(out)

    assert out.shape == (batch, embed_dim)
    assert bool(jnp.all(out >= 0.0))  # ReLU output is non-negative

    # Cross-check kernel against a plain-JAX reference using the same bf16
    # weight / bf16 activation path (f32 accumulation).
    x_vec = module.seq2vec(input_text)
    ref = jnp.maximum(
        jnp.dot(
            x_vec.astype(jnp.bfloat16),
            module.w_t_pad[:, :embed_dim],
            preferred_element_type=jnp.float32,
        )
        + module.b2d_pad[0, :embed_dim],
        0.0,
    )
    assert bool(jnp.allclose(out, ref, atol=1e-4, rtol=1e-2))

    print("KERNEL_OK")
</pallas_src>

<mosaic_0001>
module attributes {stable_mosaic.version = 11 : i64} {
  func.func @_linear_relu_kernel(%arg0: i32, %arg1: memref<16x2400xbf16, #tpu.memory_space<vmem>>, %arg2: memref<2400x128xbf16, #tpu.memory_space<vmem>>, %arg3: memref<1x128xf32, #tpu.memory_space<vmem>>, %arg4: memref<16x128xf32, #tpu.memory_space<vmem>>) attributes {dimension_semantics = [#tpu.dimension_semantics<parallel>], iteration_bounds = array<i64: 1>, scalar_prefetch = 0 : i64, scratch_operands = 0 : i64, tpu.core_type = #tpu.core_type<tc>, window_params = [{pipeline_mode = #tpu.pipeline_mode<synchronous>, transform_indices = @transform_0, window_bounds = array<i64: 16, 2400>}, {transform_indices = @transform_1, window_bounds = array<i64: 2400, 128>}, {transform_indices = @transform_2, window_bounds = array<i64: 1, 128>}, {transform_indices = @transform_3, window_bounds = array<i64: 16, 128>}]} {
    %c0 = arith.constant 0 : index
    %c0_0 = arith.constant 0 : index
    %0 = vector.load %arg1[%c0, %c0_0] : memref<16x2400xbf16, #tpu.memory_space<vmem>>, vector<16x2400xbf16>
    %c0_1 = arith.constant 0 : index
    %c0_2 = arith.constant 0 : index
    %1 = vector.load %arg2[%c0_1, %c0_2] : memref<2400x128xbf16, #tpu.memory_space<vmem>>, vector<2400x128xbf16>
    %cst = arith.constant dense<0.000000e+00> : vector<16x128xf32>
    %2 = tpu.matmul %0, %1, %cst {dimension_numbers = #tpu.dot_dimension_numbers<[1], [0], [0], [1], [0, 0, 1, 1], [], []>} : vector<16x2400xbf16>, vector<2400x128xbf16>, vector<16x128xf32> -> vector<16x128xf32>
    %c0_3 = arith.constant 0 : index
    %c0_4 = arith.constant 0 : index
    %3 = vector.load %arg3[%c0_3, %c0_4] : memref<1x128xf32, #tpu.memory_space<vmem>>, vector<1x128xf32>
    %4 = vector.broadcast %3 : vector<1x128xf32> to vector<16x128xf32>
    %5 = arith.addf %2, %4 : vector<16x128xf32>
    %cst_5 = arith.constant 0.000000e+00 : f32
    %6 = vector.broadcast %cst_5 : f32 to vector<16x128xf32>
    %7 = arith.maximumf %5, %6 : vector<16x128xf32>
    %c0_6 = arith.constant 0 : index
    %c0_7 = arith.constant 0 : index
    %8 = vector.load %arg4[%c0_6, %c0_7] : memref<16x128xf32, #tpu.memory_space<vmem>>, vector<16x128xf32>
    tpu.vector_store %arg4[%c0_6, %c0_7], %7 {strides = array<i32>} : memref<16x128xf32, #tpu.memory_space<vmem>>, vector<16x128xf32>,
    return
  }
  func.func @transform_0(%arg0: i32) -> (i32, i32) {
    %c0_i32 = arith.constant 0 : i32
    %c0_i32_0 = arith.constant 0 : i32
    %c0_i32_1 = arith.constant 0 : i32
    return %c0_i32, %c0_i32_0 : i32, i32
  }
  func.func @transform_1(%arg0: i32) -> (i32, i32) {
    %c0_i32 = arith.constant 0 : i32
    %c0_i32_0 = arith.constant 0 : i32
    return %c0_i32, %arg0 : i32, i32
  }
  func.func @transform_2(%arg0: i32) -> (i32, i32) {
    %c0_i32 = arith.constant 0 : i32
    %c0_i32_0 = arith.constant 0 : i32
    return %c0_i32, %arg0 : i32, i32
  }
  func.func @transform_3(%arg0: i32) -> (i32, i32) {
    %c0_i32 = arith.constant 0 : i32
    %c0_i32_0 = arith.constant 0 : i32
    return %c0_i32, %arg0 : i32, i32
  }
}

</mosaic_0001>

<llo_original>
// kernel: tpu_custom_call.1
$region0: #{tpu_custom_call.1}
  #allocation0 [shape = 'u32[]', space=smem, size = 0x4, offset = 0x4, fixed_abs, tag = 'smem constant byte address 0x4 - core index']
  #allocation1 [shape = 'u32[144,128]{1,0:T(1,128)}', space=vmem, size = 0x12000, scoped, tag = 'internal scratch']
  %s0 = inlined_call_operand.hbm [shape: bf16[16,2400], index: 0, kind: input, shape index: {}]
  %s1 = inlined_call_operand.hbm [shape: bf16[2400,128], index: 1, kind: input, shape index: {}]
  %s2 = inlined_call_operand.vmem [shape: f32[1,128], index: 2, kind: input, shape index: {}]
  %s3 = inlined_call_operand.hbm [shape: f32[16,128], index: 3, kind: output, shape index: {}]
  %s4 = sld [smem:[#allocation0]]
  $region30: #{tpu_custom_call.1} parent=0
    _
  %s6 = ssub.s32 1, %s4
  %s7 = scalar_select 0, %s6, %s4
  $region1: #{tpu_custom_call.1} parent=0
    #allocation2 [shape = 'u8[77824]{0}', space=vmem, size = 0x13000, scoped, tag = 'input window, operand 0, single buffered']
    #allocation3 [shape = 's32[1]{0}', space=sflag, size = 0x4, scoped, tag = 'scoped memory for tpu_custom_call.1']
    #allocation4 [shape = 's32[1]{0}', space=sflag, size = 0x4, scoped, tag = 'scoped memory for tpu_custom_call.1']
    #allocation5 [shape = 'u8[614400]{0}', space=vmem, size = 0x96000, scoped, tag = 'input window, operand 1, single buffered']
    #allocation6 [shape = 's32[1]{0}', space=sflag, size = 0x4, scoped, tag = 'scoped memory for tpu_custom_call.1']
    #allocation7 [shape = 'u8[8192]{0}', space=vmem, size = 0x2000, scoped, tag = 'output window, operand 0, single buffered']
    %8 = vsyncpa [#allocation3], 0
    %9 = vsyncpa [#allocation6], 0
    %10 = vsyncpa [#allocation4], 0
    // Predicated region
    $region2: #{tpu_custom_call.1} parent=1 // pred_check
      _
    $region3: #{tpu_custom_call.1} parent=1 // pred_check_branch
      %12 = sbr.rel (0) target = $region5
    $region4: #{tpu_custom_call.1} parent=1 // pred_region
      %s14 = ssub.s32 2432, 2432
      %15 = vsyncadd [#allocation3], %s14
      %s16 = sshll.u32 [#allocation2], 4
      %s17 = int_to_ptr.vmem [resolvable:$true] %s16
      %22 = dma.hbm_to_vmem [thread:$0]  %s0, 2432, %s17, [#allocation3], 1216, 1216, 76
    $region5: #{tpu_custom_call.1} parent=1 // pred_fallthru
      _
    // Predicated region
    $region6: #{tpu_custom_call.1} parent=1 // pred_check
      _
    $region7: #{tpu_custom_call.1} parent=1 // pred_check_branch
      %24 = sbr.rel (0) target = $region9
    $region8: #{tpu_custom_call.1} parent=1 // pred_region
      %s26 = ssub.s32 19200, 19200
      %27 = vsyncadd [#allocation6], %s26
      %s28 = sshll.u32 [#allocation5], 4
      %s29 = int_to_ptr.vmem [resolvable:$true] %s28
      %34 = dma.hbm_to_vmem [thread:$0]  %s1, 19200, %s29, [#allocation6], 64, 64, 4
    $region9: #{tpu_custom_call.1} parent=1 // pred_fallthru
      _
    // Predicated region
    $region10: #{tpu_custom_call.1} parent=1 // pred_check
      _
    $region11: #{tpu_custom_call.1} parent=1 // pred_check_branch
      %36 = sbr.rel (0) target = $region13
    $region12: #{tpu_custom_call.1} parent=1 // pred_region
      _
    $region13: #{tpu_custom_call.1} parent=1 // pred_fallthru
      _
    // Predicated region
    $region14: #{tpu_custom_call.1} parent=1 // pred_check
      _
    $region15: #{tpu_custom_call.1} parent=1 // pred_check_branch
      %38 = sbr.rel (0) target = $region17
    $region16: #{tpu_custom_call.1} parent=1 // pred_region
      %39 = dma.done [#allocation3], 2432
    $region17: #{tpu_custom_call.1} parent=1 // pred_fallthru
      _
    // Predicated region
    $region18: #{tpu_custom_call.1} parent=1 // pred_check
      _
    $region19: #{tpu_custom_call.1} parent=1 // pred_check_branch
      %41 = sbr.rel (0) target = $region21
    $region20: #{tpu_custom_call.1} parent=1 // pred_region
      %42 = dma.done [#allocation6], 19200
    $region21: #{tpu_custom_call.1} parent=1 // pred_fallthru
      _
    %v44 = vld [vmem:[#allocation2] sm:$0xff]
    %v45 = vld [vmem:[#allocation2 + $0x8] sm:$0xff]
    %v46 = vld [vmem:[#allocation2 + $0x10] sm:$0xff]
    %v47 = vld [vmem:[#allocation2 + $0x18] sm:$0xff]
    %v48 = vld [vmem:[#allocation2 + $0x20] sm:$0xff]
    %v49 = vld [vmem:[#allocation2 + $0x28] sm:$0xff]
    %v50 = vld [vmem:[#allocation2 + $0x30] sm:$0xff]
    %v51 = vld [vmem:[#allocation2 + $0x38] sm:$0xff]
    %v52 = vld [vmem:[#allocation2 + $0x40] sm:$0xff]
    %v53 = vld [vmem:[#allocation2 + $0x48] sm:$0xf]
    %v54 = vld [vmem:[#allocation2 + $0x4c] sm:$0xff]
    %v55 = vld [vmem:[#allocation2 + $0x54] sm:$0xff]
    %v56 = vld [vmem:[#allocation2 + $0x5c] sm:$0xff]
    %v57 = vld [vmem:[#allocation2 + $0x64] sm:$0xff]
    %v58 = vld [vmem:[#allocation2 + $0x6c] sm:$0xff]
    %v59 = vld [vmem:[#allocation2 + $0x74] sm:$0xff]
    %v60 = vld [vmem:[#allocation2 + $0x7c] sm:$0xff]
    %v61 = vld [vmem:[#allocation2 + $0x84] sm:$0xff]
    %v62 = vld [vmem:[#allocation2 + $0x8c] sm:$0xff]
    %v63 = vld [vmem:[#allocation2 + $0x94] sm:$0xf]
    %v64 = vld [vmem:[#allocation5] sm:$0xf]
    %v65 = vld [vmem:[#allocation5 + $0x4] sm:$0xf]
    %v66 = vld [vmem:[#allocation5 + $0x8] sm:$0xf]
    %v67 = vld [vmem:[#allocation5 + $0xc] sm:$0xf]
    %v68 = vld [vmem:[#allocation5 + $0x10] sm:$0xf]
    %v69 = vld [vmem:[#allocation5 + $0x14] sm:$0xf]
    %v70 = vld [vmem:[#allocation5 + $0x18] sm:$0xf]
    %v71 = vld [vmem:[#allocation5 + $0x1c] sm:$0xf]
    %v72 = vld [vmem:[#allocation5 + $0x20] sm:$0xf]
    %v73 = vld [vmem:[#allocation5 + $0x24] sm:$0xf]
    %v74 = vld [vmem:[#allocation5 + $0x28] sm:$0xf]
    %v75 = vld [vmem:[#allocation5 + $0x2c] sm:$0xf]
    %v76 = vld [vmem:[#allocation5 + $0x30] sm:$0xf]
    %v77 = vld [vmem:[#allocation5 + $0x34] sm:$0xf]
    %v78 = vld [vmem:[#allocation5 + $0x38] sm:$0xf]
    %v79 = vld [vmem:[#allocation5 + $0x3c] sm:$0xf]
    %v80 = vld [vmem:[#allocation5 + $0x40] sm:$0xf]
    %v81 = vld [vmem:[#allocation5 + $0x44] sm:$0xf]
    %v82 = vld [vmem:[#allocation5 + $0x48] sm:$0xf]
    %v83 = vld [vmem:[#allocation5 + $0x4c] sm:$0xf]
    %v84 = vld [vmem:[#allocation5 + $0x50] sm:$0xf]
    %v85 = vld [vmem:[#allocation5 + $0x54] sm:$0xf]
    %v86 = vld [vmem:[#allocation5 + $0x58] sm:$0xf]
    %v87 = vld [vmem:[#allocation5 + $0x5c] sm:$0xf]
    %v88 = vld [vmem:[#allocation5 + $0x60] sm:$0xf]
    %v89 = vld [vmem:[#allocation5 + $0x64] sm:$0xf]
    %v90 = vld [vmem:[#allocation5 + $0x68] sm:$0xf]
    %v91 = vld [vmem:[#allocation5 + $0x6c] sm:$0xf]
    %v92 = vld [vmem:[#allocation5 + $0x70] sm:$0xf]
    %v93 = vld [vmem:[#allocation5 + $0x74] sm:$0xf]
    %v94 = vld [vmem:[#allocation5 + $0x78] sm:$0xf]
    %v95 = vld [vmem:[#allocation5 + $0x7c] sm:$0xf]
    %v96 = vld [vmem:[#allocation5 + $0x80] sm:$0xf]
    %v97 = vld [vmem:[#allocation5 + $0x84] sm:$0xf]
    %v98 = vld [vmem:[#allocation5 + $0x88] sm:$0xf]
    %v99 = vld [vmem:[#allocation5 + $0x8c] sm:$0xf]
    %v100 = vld [vmem:[#allocation5 + $0x90] sm:$0xf]
    %v101 = vld [vmem:[#allocation5 + $0x94] sm:$0xf]
    %v102 = vld [vmem:[#allocation5 + $0x98] sm:$0xf]
    %v103 = vld [vmem:[#allocation5 + $0x9c] sm:$0xf]
    %v104 = vld [vmem:[#allocation5 + $0xa0] sm:$0xf]
    %v105 = vld [vmem:[#allocation5 + $0xa4] sm:$0xf]
    %v106 = vld [vmem:[#allocation5 + $0xa8] sm:$0xf]
    %v107 = vld [vmem:[#allocation5 + $0xac] sm:$0xf]
    %v108 = vld [vmem:[#allocation5 + $0xb0] sm:$0xf]
    %v109 = vld [vmem:[#allocation5 + $0xb4] sm:$0xf]
    %v110 = vld [vmem:[#allocation5 + $0xb8] sm:$0xf]
    %v111 = vld [vmem:[#allocation5 + $0xbc] sm:$0xf]
    %v112 = vld [vmem:[#allocation5 + $0xc0] sm:$0xf]
    %v113 = vld [vmem:[#allocation5 + $0xc4] sm:$0xf]
    %v114 = vld [vmem:[#allocation5 + $0xc8] sm:$0xf]
    %v115 = vld [vmem:[#allocation5 + $0xcc] sm:$0xf]
    %v116 = vld [vmem:[#allocation5 + $0xd0] sm:$0xf]
    %v117 = vld [vmem:[#allocation5 + $0xd4] sm:$0xf]
    %v118 = vld [vmem:[#allocation5 + $0xd8] sm:$0xf]
    %v119 = vld [vmem:[#allocation5 + $0xdc] sm:$0xf]
    %v120 = vld [vmem:[#allocation5 + $0xe0] sm:$0xf]
    %v121 = vld [vmem:[#allocation5 + $0xe4] sm:$0xf]
    %v122 = vld [vmem:[#allocation5 + $0xe8] sm:$0xf]
    %v123 = vld [vmem:[#allocation5 + $0xec] sm:$0xf]
    %v124 = vld [vmem:[#allocation5 + $0xf0] sm:$0xf]
    %v125 = vld [vmem:[#allocation5 + $0xf4] sm:$0xf]
    %v126 = vld [vmem:[#allocation5 + $0xf8] sm:$0xf]
    %v127 = vld [vmem:[#allocation5 + $0xfc] sm:$0xf]
    %v128 = vld [vmem:[#allocation5 + $0x100] sm:$0xf]
    %v129 = vld [vmem:[#allocation5 + $0x104] sm:$0xf]
    %v130 = vld [vmem:[#allocation5 + $0x108] sm:$0xf]
    %v131 = vld [vmem:[#allocation5 + $0x10c] sm:$0xf]
    %v132 = vld [vmem:[#allocation5 + $0x110] sm:$0xf]
    %v133 = vld [vmem:[#allocation5 + $0x114] sm:$0xf]
    %v134 = vld [vmem:[#allocation5 + $0x118] sm:$0xf]
    %v135 = vld [vmem:[#allocation5 + $0x11c] sm:$0xf]
    %v136 = vld [vmem:[#allocation5 + $0x120] sm:$0xf]
    %v137 = vld [vmem:[#allocation5 + $0x124] sm:$0xf]
    %v138 = vld [vmem:[#allocation5 + $0x128] sm:$0xf]
    %v139 = vld [vmem:[#allocation5 + $0x12c] sm:$0xf]
    %v140 = vld [vmem:[#allocation5 + $0x130] sm:$0xf]
    %v141 = vld [vmem:[#allocation5 + $0x134] sm:$0xf]
    %v142 = vld [vmem:[#allocation5 + $0x138] sm:$0xf]
    %v143 = vld [vmem:[#allocation5 + $0x13c] sm:$0xf]
    %v144 = vld [vmem:[#allocation5 + $0x140] sm:$0xf]
    %v145 = vld [vmem:[#allocation5 + $0x144] sm:$0xf]
    %v146 = vld [vmem:[#allocation5 + $0x148] sm:$0xf]
    %v147 = vld [vmem:[#allocation5 + $0x14c] sm:$0xf]
    %v148 = vld [vmem:[#allocation5 + $0x150] sm:$0xf]
    %v149 = vld [vmem:[#allocation5 + $0x154] sm:$0xf]
    %v150 = vld [vmem:[#allocation5 + $0x158] sm:$0xf]
    %v151 = vld [vmem:[#allocation5 + $0x15c] sm:$0xf]
    %v152 = vld [vmem:[#allocation5 + $0x160] sm:$0xf]
    %v153 = vld [vmem:[#allocation5 + $0x164] sm:$0xf]
    %v154 = vld [vmem:[#allocation5 + $0x168] sm:$0xf]
    %v155 = vld [vmem:[#allocation5 + $0x16c] sm:$0xf]
    %v156 = vld [vmem:[#allocation5 + $0x170] sm:$0xf]
    %v157 = vld [vmem:[#allocation5 + $0x174] sm:$0xf]
    %v158 = vld [vmem:[#allocation5 + $0x178] sm:$0xf]
    %v159 = vld [vmem:[#allocation5 + $0x17c] sm:$0xf]
    %v160 = vld [vmem:[#allocation5 + $0x180] sm:$0xf]
    %v161 = vld [vmem:[#allocation5 + $0x184] sm:$0xf]
    %v162 = vld [vmem:[#allocation5 + $0x188] sm:$0xf]
    %v163 = vld [vmem:[#allocation5 + $0x18c] sm:$0xf]
    %v164 = vld [vmem:[#allocation5 + $0x190] sm:$0xf]
    %v165 = vld [vmem:[#allocation5 + $0x194] sm:$0xf]
    %v166 = vld [vmem:[#allocation5 + $0x198] sm:$0xf]
    %v167 = vld [vmem:[#allocation5 + $0x19c] sm:$0xf]
    %v168 = vld [vmem:[#allocation5 + $0x1a0] sm:$0xf]
    %v169 = vld [vmem:[#allocation5 + $0x1a4] sm:$0xf]
    %v170 = vld [vmem:[#allocation5 + $0x1a8] sm:$0xf]
    %v171 = vld [vmem:[#allocation5 + $0x1ac] sm:$0xf]
    %v172 = vld [vmem:[#allocation5 + $0x1b0] sm:$0xf]
    %v173 = vld [vmem:[#allocation5 + $0x1b4] sm:$0xf]
    %v174 = vld [vmem:[#allocation5 + $0x1b8] sm:$0xf]
    %v175 = vld [vmem:[#allocation5 + $0x1bc] sm:$0xf]
    %v176 = vld [vmem:[#allocation5 + $0x1c0] sm:$0xf]
    %v177 = vld [vmem:[#allocation5 + $0x1c4] sm:$0xf]
    %v178 = vld [vmem:[#allocation5 + $0x1c8] sm:$0xf]
    %v179 = vld [vmem:[#allocation5 + $0x1cc] sm:$0xf]
    %v180 = vld [vmem:[#allocation5 + $0x1d0] sm:$0xf]
    %v181 = vld [vmem:[#allocation5 + $0x1d4] sm:$0xf]
    %v182 = vld [vmem:[#allocation5 + $0x1d8] sm:$0xf]
    %v183 = vld [vmem:[#allocation5 + $0x1dc] sm:$0xf]
    %v184 = vld [vmem:[#allocation5 + $0x1e0] sm:$0xf]
    %v185 = vld [vmem:[#allocation5 + $0x1e4] sm:$0xf]
    %v186 = vld [vmem:[#allocation5 + $0x1e8] sm:$0xf]
    %v187 = vld [vmem:[#allocation5 + $0x1ec] sm:$0xf]
    %v188 = vld [vmem:[#allocation5 + $0x1f0] sm:$0xf]
    %v189 = vld [vmem:[#allocation5 + $0x1f4] sm:$0xf]
    %v190 = vld [vmem:[#allocation5 + $0x1f8] sm:$0xf]
    %v191 = vld [vmem:[#allocation5 + $0x1fc] sm:$0xf]
    %v192 = vld [vmem:[#allocation5 + $0x200] sm:$0xf]
    %v193 = vld [vmem:[#allocation5 + $0x204] sm:$0xf]
    %v194 = vld [vmem:[#allocation5 + $0x208] sm:$0xf]
    %v195 = vld [vmem:[#allocation5 + $0x20c] sm:$0xf]
    %v196 = vld [vmem:[#allocation5 + $0x210] sm:$0xf]
    %v197 = vld [vmem:[#allocation5 + $0x214] sm:$0xf]
    %v198 = vld [vmem:[#allocation5 + $0x218] sm:$0xf]
    %v199 = vld [vmem:[#allocation5 + $0x21c] sm:$0xf]
    %v200 = vld [vmem:[#allocation5 + $0x220] sm:$0xf]
    %v201 = vld [vmem:[#allocation5 + $0x224] sm:$0xf]
    %v202 = vld [vmem:[#allocation5 + $0x228] sm:$0xf]
    %v203 = vld [vmem:[#allocation5 + $0x22c] sm:$0xf]
    %v204 = vld [vmem:[#allocation5 + $0x230] sm:$0xf]
    %v205 = vld [vmem:[#allocation5 + $0x234] sm:$0xf]
    %v206 = vld [vmem:[#allocation5 + $0x238] sm:$0xf]
    %v207 = vld [vmem:[#allocation5 + $0x23c] sm:$0xf]
    %v208 = vld [vmem:[#allocation5 + $0x240] sm:$0xf]
    %v209 = vld [vmem:[#allocation5 + $0x244] sm:$0xf]
    %v210 = vld [vmem:[#allocation5 + $0x248] sm:$0xf]
    %v211 = vld [vmem:[#allocation5 + $0x24c] sm:$0xf]
    %v212 = vld [vmem:[#allocation5 + $0x250] sm:$0xf]
    %v213 = vld [vmem:[#allocation5 + $0x254] sm:$0xf]
    %v214 = vld [vmem:[#allocation5 + $0x258] sm:$0xf]
    %v215 = vld [vmem:[#allocation5 + $0x25c] sm:$0xf]
    %v216 = vld [vmem:[#allocation5 + $0x260] sm:$0xf]
    %v217 = vld [vmem:[#allocation5 + $0x264] sm:$0xf]
    %v218 = vld [vmem:[#allocation5 + $0x268] sm:$0xf]
    %v219 = vld [vmem:[#allocation5 + $0x26c] sm:$0xf]
    %v220 = vld [vmem:[#allocation5 + $0x270] sm:$0xf]
    %v221 = vld [vmem:[#allocation5 + $0x274] sm:$0xf]
    %v222 = vld [vmem:[#allocation5 + $0x278] sm:$0xf]
    %v223 = vld [vmem:[#allocation5 + $0x27c] sm:$0xf]
    %v224 = vld [vmem:[#allocation5 + $0x280] sm:$0xf]
    %v225 = vld [vmem:[#allocation5 + $0x284] sm:$0xf]
    %v226 = vld [vmem:[#allocation5 + $0x288] sm:$0xf]
    %v227 = vld [vmem:[#allocation5 + $0x28c] sm:$0xf]
    %v228 = vld [vmem:[#allocation5 + $0x290] sm:$0xf]
    %v229 = vld [vmem:[#allocation5 + $0x294] sm:$0xf]
    %v230 = vld [vmem:[#allocation5 + $0x298] sm:$0xf]
    %v231 = vld [vmem:[#allocation5 + $0x29c] sm:$0xf]
    %v232 = vld [vmem:[#allocation5 + $0x2a0] sm:$0xf]
    %v233 = vld [vmem:[#allocation5 + $0x2a4] sm:$0xf]
    %v234 = vld [vmem:[#allocation5 + $0x2a8] sm:$0xf]
    %v235 = vld [vmem:[#allocation5 + $0x2ac] sm:$0xf]
    %v236 = vld [vmem:[#allocation5 + $0x2b0] sm:$0xf]
    %v237 = vld [vmem:[#allocation5 + $0x2b4] sm:$0xf]
    %v238 = vld [vmem:[#allocation5 + $0x2b8] sm:$0xf]
    %v239 = vld [vmem:[#allocation5 + $0x2bc] sm:$0xf]
    %v240 = vld [vmem:[#allocation5 + $0x2c0] sm:$0xf]
    %v241 = vld [vmem:[#allocation5 + $0x2c4] sm:$0xf]
    %v242 = vld [vmem:[#allocation5 + $0x2c8] sm:$0xf]
    %v243 = vld [vmem:[#allocation5 + $0x2cc] sm:$0xf]
    %v244 = vld [vmem:[#allocation5 + $0x2d0] sm:$0xf]
    %v245 = vld [vmem:[#allocation5 + $0x2d4] sm:$0xf]
    %v246 = vld [vmem:[#allocation5 + $0x2d8] sm:$0xf]
    %v247 = vld [vmem:[#allocation5 + $0x2dc] sm:$0xf]
    %v248 = vld [vmem:[#allocation5 + $0x2e0] sm:$0xf]
    %v249 = vld [vmem:[#allocation5 + $0x2e4] sm:$0xf]
    %v250 = vld [vmem:[#allocation5 + $0x2e8] sm:$0xf]
    %v251 = vld [vmem:[#allocation5 + $0x2ec] sm:$0xf]
    %v252 = vld [vmem:[#allocation5 + $0x2f0] sm:$0xf]
    %v253 = vld [vmem:[#allocation5 + $0x2f4] sm:$0xf]
    %v254 = vld [vmem:[#allocation5 + $0x2f8] sm:$0xf]
    %v255 = vld [vmem:[#allocation5 + $0x2fc] sm:$0xf]
    %v256 = vld [vmem:[#allocation5 + $0x300] sm:$0xf]
    %v257 = vld [vmem:[#allocation5 + $0x304] sm:$0xf]
    %v258 = vld [vmem:[#allocation5 + $0x308] sm:$0xf]
    %v259 = vld [vmem:[#allocation5 + $0x30c] sm:$0xf]
    %v260 = vld [vmem:[#allocation5 + $0x310] sm:$0xf]
    %v261 = vld [vmem:[#allocation5 + $0x314] sm:$0xf]
    %v262 = vld [vmem:[#allocation5 + $0x318] sm:$0xf]
    %v263 = vld [vmem:[#allocation5 + $0x31c] sm:$0xf]
    %v264 = vld [vmem:[#allocation5 + $0x320] sm:$0xf]
    %v265 = vld [vmem:[#allocation5 + $0x324] sm:$0xf]
    %v266 = vld [vmem:[#allocation5 + $0x328] sm:$0xf]
    %v267 = vld [vmem:[#allocation5 + $0x32c] sm:$0xf]
    %v268 = vld [vmem:[#allocation5 + $0x330] sm:$0xf]
    %v269 = vld [vmem:[#allocation5 + $0x334] sm:$0xf]
    %v270 = vld [vmem:[#allocation5 + $0x338] sm:$0xf]
    %v271 = vld [vmem:[#allocation5 + $0x33c] sm:$0xf]
    %v272 = vld [vmem:[#allocation5 + $0x340] sm:$0xf]
    %v273 = vld [vmem:[#allocation5 + $0x344] sm:$0xf]
    %v274 = vld [vmem:[#allocation5 + $0x348] sm:$0xf]
    %v275 = vld [vmem:[#allocation5 + $0x34c] sm:$0xf]
    %v276 = vld [vmem:[#allocation5 + $0x350] sm:$0xf]
    %v277 = vld [vmem:[#allocation5 + $0x354] sm:$0xf]
    %v278 = vld [vmem:[#allocation5 + $0x358] sm:$0xf]
    %v279 = vld [vmem:[#allocation5 + $0x35c] sm:$0xf]
    %v280 = vld [vmem:[#allocation5 + $0x360] sm:$0xf]
    %v281 = vld [vmem:[#allocation5 + $0x364] sm:$0xf]
    %v282 = vld [vmem:[#allocation5 + $0x368] sm:$0xf]
    %v283 = vld [vmem:[#allocation5 + $0x36c] sm:$0xf]
    %v284 = vld [vmem:[#allocation5 + $0x370] sm:$0xf]
    %v285 = vld [vmem:[#allocation5 + $0x374] sm:$0xf]
    %v286 = vld [vmem:[#allocation5 + $0x378] sm:$0xf]
    %v287 = vld [vmem:[#allocation5 + $0x37c] sm:$0xf]
    %v288 = vld [vmem:[#allocation5 + $0x380] sm:$0xf]
    %v289 = vld [vmem:[#allocation5 + $0x384] sm:$0xf]
    %v290 = vld [vmem:[#allocation5 + $0x388] sm:$0xf]
    %v291 = vld [vmem:[#allocation5 + $0x38c] sm:$0xf]
    %v292 = vld [vmem:[#allocation5 + $0x390] sm:$0xf]
    %v293 = vld [vmem:[#allocation5 + $0x394] sm:$0xf]
    %v294 = vld [vmem:[#allocation5 + $0x398] sm:$0xf]
    %v295 = vld [vmem:[#allocation5 + $0x39c] sm:$0xf]
    %v296 = vld [vmem:[#allocation5 + $0x3a0] sm:$0xf]
    %v297 = vld [vmem:[#allocation5 + $0x3a4] sm:$0xf]
    %v298 = vld [vmem:[#allocation5 + $0x3a8] sm:$0xf]
    %v299 = vld [vmem:[#allocation5 + $0x3ac] sm:$0xf]
    %v300 = vld [vmem:[#allocation5 + $0x3b0] sm:$0xf]
    %v301 = vld [vmem:[#allocation5 + $0x3b4] sm:$0xf]
    %v302 = vld [vmem:[#allocation5 + $0x3b8] sm:$0xf]
    %v303 = vld [vmem:[#allocation5 + $0x3bc] sm:$0xf]
    %v304 = vld [vmem:[#allocation5 + $0x3c0] sm:$0xf]
    %v305 = vld [vmem:[#allocation5 + $0x3c4] sm:$0xf]
    %v306 = vld [vmem:[#allocation5 + $0x3c8] sm:$0xf]
    %v307 = vld [vmem:[#allocation5 + $0x3cc] sm:$0xf]
    %v308 = vld [vmem:[#allocation5 + $0x3d0] sm:$0xf]
    %v309 = vld [vmem:[#allocation5 + $0x3d4] sm:$0xf]
    %v310 = vld [vmem:[#allocation5 + $0x3d8] sm:$0xf]
    %v311 = vld [vmem:[#allocation5 + $0x3dc] sm:$0xf]
    %v312 = vld [vmem:[#allocation5 + $0x3e0] sm:$0xf]
    %v313 = vld [vmem:[#allocation5 + $0x3e4] sm:$0xf]
    %v314 = vld [vmem:[#allocation5 + $0x3e8] sm:$0xf]
    %v315 = vld [vmem:[#allocation5 + $0x3ec] sm:$0xf]
    %v316 = vld [vmem:[#allocation5 + $0x3f0] sm:$0xf]
    %v317 = vld [vmem:[#allocation5 + $0x3f4] sm:$0xf]
    %v318 = vld [vmem:[#allocation5 + $0x3f8] sm:$0xf]
    %v319 = vld [vmem:[#allocation5 + $0x3fc] sm:$0xf]
    %v320 = vld [vmem:[#allocation5 + $0x400] sm:$0xf]
    %v321 = vld [vmem:[#allocation5 + $0x404] sm:$0xf]
    %v322 = vld [vmem:[#allocation5 + $0x408] sm:$0xf]
    %v323 = vld [vmem:[#allocation5 + $0x40c] sm:$0xf]
    %v324 = vld [vmem:[#allocation5 + $0x410] sm:$0xf]
    %v325 = vld [vmem:[#allocation5 + $0x414] sm:$0xf]
    %v326 = vld [vmem:[#allocation5 + $0x418] sm:$0xf]
    %v327 = vld [vmem:[#allocation5 + $0x41c] sm:$0xf]
    %v328 = vld [vmem:[#allocation5 + $0x420] sm:$0xf]
    %v329 = vld [vmem:[#allocation5 + $0x424] sm:$0xf]
    %v330 = vld [vmem:[#allocation5 + $0x428] sm:$0xf]
    %v331 = vld [vmem:[#allocation5 + $0x42c] sm:$0xf]
    %v332 = vld [vmem:[#allocation5 + $0x430] sm:$0xf]
    %v333 = vld [vmem:[#allocation5 + $0x434] sm:$0xf]
    %v334 = vld [vmem:[#allocation5 + $0x438] sm:$0xf]
    %v335 = vld [vmem:[#allocation5 + $0x43c] sm:$0xf]
    %v336 = vld [vmem:[#allocation5 + $0x440] sm:$0xf]
    %v337 = vld [vmem:[#allocation5 + $0x444] sm:$0xf]
    %v338 = vld [vmem:[#allocation5 + $0x448] sm:$0xf]
    %v339 = vld [vmem:[#allocation5 + $0x44c] sm:$0xf]
    %v340 = vld [vmem:[#allocation5 + $0x450] sm:$0xf]
    %v341 = vld [vmem:[#allocation5 + $0x454] sm:$0xf]
    %v342 = vld [vmem:[#allocation5 + $0x458] sm:$0xf]
    %v343 = vld [vmem:[#allocation5 + $0x45c] sm:$0xf]
    %v344 = vld [vmem:[#allocation5 + $0x460] sm:$0xf]
    %v345 = vld [vmem:[#allocation5 + $0x464] sm:$0xf]
    %v346 = vld [vmem:[#allocation5 + $0x468] sm:$0xf]
    %v347 = vld [vmem:[#allocation5 + $0x46c] sm:$0xf]
    %v348 = vld [vmem:[#allocation5 + $0x470] sm:$0xf]
    %v349 = vld [vmem:[#allocation5 + $0x474] sm:$0xf]
    %v350 = vld [vmem:[#allocation5 + $0x478] sm:$0xf]
    %v351 = vld [vmem:[#allocation5 + $0x47c] sm:$0xf]
    %v352 = vld [vmem:[#allocation5 + $0x480] sm:$0xf]
    %v353 = vld [vmem:[#allocation5 + $0x484] sm:$0xf]
    %v354 = vld [vmem:[#allocation5 + $0x488] sm:$0xf]
    %v355 = vld [vmem:[#allocation5 + $0x48c] sm:$0xf]
    %v356 = vld [vmem:[#allocation5 + $0x490] sm:$0xf]
    %v357 = vld [vmem:[#allocation5 + $0x494] sm:$0xf]
    %v358 = vld [vmem:[#allocation5 + $0x498] sm:$0xf]
    %v359 = vld [vmem:[#allocation5 + $0x49c] sm:$0xf]
    %v360 = vld [vmem:[#allocation5 + $0x4a0] sm:$0xf]
    %v361 = vld [vmem:[#allocation5 + $0x4a4] sm:$0xf]
    %v362 = vld [vmem:[#allocation5 + $0x4a8] sm:$0xf]
    %v363 = vld [vmem:[#allocation5 + $0x4ac] sm:$0xf]
    %v364 = vld [vmem:[%s2] sm:$0x1]
    %v366 = vlaneseq
    %v367 = vshrl.u32 %v366, 7
    %v368 = vsub.s32 0, %v367
    %v369 = vrot.slane %v364, %v368
    %v391 = vunpack.c.l.b16 %v44
    %v392 = vunpack.c.h.b16 %v44
    %v393 = vunpack.c.l.b16 %v45
    %v394 = vunpack.c.h.b16 %v45
    %v395 = vunpack.c.l.b16 %v46
    %v396 = vunpack.c.h.b16 %v46
    %v397 = vunpack.c.l.b16 %v47
    %v398 = vunpack.c.h.b16 %v47
    %v399 = vunpack.c.l.b16 %v48
    %v400 = vunpack.c.h.b16 %v48
    %v401 = vunpack.c.l.b16 %v49
    %v402 = vunpack.c.h.b16 %v49
    %v403 = vunpack.c.l.b16 %v50
    %v404 = vunpack.c.h.b16 %v50
    %v405 = vunpack.c.l.b16 %v51
    %v406 = vunpack.c.h.b16 %v51
    %v407 = vunpack.c.l.b16 %v52
    %v408 = vunpack.c.h.b16 %v52
    %v409 = vunpack.c.l.b16 %v53
    %v410 = vunpack.c.l.b16 %v54
    %v411 = vunpack.c.h.b16 %v54
    %v412 = vunpack.c.l.b16 %v55
    %v413 = vunpack.c.h.b16 %v55
    %v414 = vunpack.c.l.b16 %v56
    %v415 = vunpack.c.h.b16 %v56
    %v416 = vunpack.c.l.b16 %v57
    %v417 = vunpack.c.h.b16 %v57
    %v418 = vunpack.c.l.b16 %v58
    %v419 = vunpack.c.h.b16 %v58
    %v420 = vunpack.c.l.b16 %v59
    %v421 = vunpack.c.h.b16 %v59
    %v422 = vunpack.c.l.b16 %v60
    %v423 = vunpack.c.h.b16 %v60
    %v424 = vunpack.c.l.b16 %v61
    %v425 = vunpack.c.h.b16 %v61
    %v426 = vunpack.c.l.b16 %v62
    %v427 = vunpack.c.h.b16 %v62
    %v428 = vunpack.c.l.b16 %v63
    %v429 = vpack.c.b16 %v410, %v391
    %v430 = vpack.c.b16 %v411, %v392
    %v431 = vpack.c.b16 %v412, %v393
    %v432 = vpack.c.b16 %v413, %v394
    %v433 = vpack.c.b16 %v414, %v395
    %v434 = vpack.c.b16 %v415, %v396
    %v435 = vpack.c.b16 %v416, %v397
    %v436 = vpack.c.b16 %v417, %v398
    %v437 = vpack.c.b16 %v418, %v399
    %v438 = vpack.c.b16 %v419, %v400
    %v439 = vpack.c.b16 %v420, %v401
    %v440 = vpack.c.b16 %v421, %v402
    %v441 = vpack.c.b16 %v422, %v403
    %v442 = vpack.c.b16 %v423, %v404
    %v443 = vpack.c.b16 %v424, %v405
    %v444 = vpack.c.b16 %v425, %v406
    %v445 = vpack.c.b16 %v426, %v407
    %v446 = vpack.c.b16 %v427, %v408
    %v447 = vpack.c.b16 %v428, %v409
    %v766 = vunpack.c.l.b16 %v64
    %v767 = vunpack.c.l.b16 %v65
    %v768 = vunpack.c.l.b16 %v66
    %v769 = vunpack.c.l.b16 %v67
    %v770 = vunpack.c.l.b16 %v68
    %v771 = vunpack.c.l.b16 %v69
    %v772 = vunpack.c.l.b16 %v70
    %v773 = vunpack.c.l.b16 %v71
    %v774 = vunpack.c.l.b16 %v72
    %v775 = vunpack.c.l.b16 %v73
    %v776 = vunpack.c.l.b16 %v74
    %v777 = vunpack.c.l.b16 %v75
    %v778 = vunpack.c.l.b16 %v76
    %v779 = vunpack.c.l.b16 %v77
    %v780 = vunpack.c.l.b16 %v78
    %v781 = vunpack.c.l.b16 %v79
    %v782 = vunpack.c.l.b16 %v80
    %v783 = vunpack.c.l.b16 %v81
    %v784 = vunpack.c.l.b16 %v82
    %v785 = vunpack.c.l.b16 %v83
    %v786 = vunpack.c.l.b16 %v84
    %v787 = vunpack.c.l.b16 %v85
    %v788 = vunpack.c.l.b16 %v86
    %v789 = vunpack.c.l.b16 %v87
    %v790 = vunpack.c.l.b16 %v88
    %v791 = vunpack.c.l.b16 %v89
    %v792 = vunpack.c.l.b16 %v90
    %v793 = vunpack.c.l.b16 %v91
    %v794 = vunpack.c.l.b16 %v92
    %v795 = vunpack.c.l.b16 %v93
    %v796 = vunpack.c.l.b16 %v94
    %v797 = vunpack.c.l.b16 %v95
    %v798 = vunpack.c.l.b16 %v96
    %v799 = vunpack.c.l.b16 %v97
    %v800 = vunpack.c.l.b16 %v98
    %v801 = vunpack.c.l.b16 %v99
    %v802 = vunpack.c.l.b16 %v100
    %v803 = vunpack.c.l.b16 %v101
    %v804 = vunpack.c.l.b16 %v102
    %v805 = vunpack.c.l.b16 %v103
    %v806 = vunpack.c.l.b16 %v104
    %v807 = vunpack.c.l.b16 %v105
    %v808 = vunpack.c.l.b16 %v106
    %v809 = vunpack.c.l.b16 %v107
    %v810 = vunpack.c.l.b16 %v108
    %v811 = vunpack.c.l.b16 %v109
    %v812 = vunpack.c.l.b16 %v110
    %v813 = vunpack.c.l.b16 %v111
    %v814 = vunpack.c.l.b16 %v112
    %v815 = vunpack.c.l.b16 %v113
    %v816 = vunpack.c.l.b16 %v114
    %v817 = vunpack.c.l.b16 %v115
    %v818 = vunpack.c.l.b16 %v116
    %v819 = vunpack.c.l.b16 %v117
    %v820 = vunpack.c.l.b16 %v118
    %v821 = vunpack.c.l.b16 %v119
    %v822 = vunpack.c.l.b16 %v120
    %v823 = vunpack.c.l.b16 %v121
    %v824 = vunpack.c.l.b16 %v122
    %v825 = vunpack.c.l.b16 %v123
    %v826 = vunpack.c.l.b16 %v124
    %v827 = vunpack.c.l.b16 %v125
    %v828 = vunpack.c.l.b16 %v126
    %v829 = vunpack.c.l.b16 %v127
    %v830 = vunpack.c.l.b16 %v128
    %v831 = vunpack.c.l.b16 %v129
    %v832 = vunpack.c.l.b16 %v130
    %v833 = vunpack.c.l.b16 %v131
    %v834 = vunpack.c.l.b16 %v132
    %v835 = vunpack.c.l.b16 %v133
    %v836 = vunpack.c.l.b16 %v134
    %v837 = vunpack.c.l.b16 %v135
    %v838 = vunpack.c.l.b16 %v136
    %v839 = vunpack.c.l.b16 %v137
    %v840 = vunpack.c.l.b16 %v138
    %v841 = vunpack.c.l.b16 %v139
    %v842 = vunpack.c.l.b16 %v140
    %v843 = vunpack.c.l.b16 %v141
    %v844 = vunpack.c.l.b16 %v142
    %v845 = vunpack.c.l.b16 %v143
    %v846 = vunpack.c.l.b16 %v144
    %v847 = vunpack.c.l.b16 %v145
    %v848 = vunpack.c.l.b16 %v146
    %v849 = vunpack.c.l.b16 %v147
    %v850 = vunpack.c.l.b16 %v148
    %v851 = vunpack.c.l.b16 %v149
    %v852 = vunpack.c.l.b16 %v150
    %v853 = vunpack.c.l.b16 %v151
    %v854 = vunpack.c.l.b16 %v152
    %v855 = vunpack.c.l.b16 %v153
    %v856 = vunpack.c.l.b16 %v154
    %v857 = vunpack.c.l.b16 %v155
    %v858 = vunpack.c.l.b16 %v156
    %v859 = vunpack.c.l.b16 %v157
    %v860 = vunpack.c.l.b16 %v158
    %v861 = vunpack.c.l.b16 %v159
    %v862 = vunpack.c.l.b16 %v160
    %v863 = vunpack.c.l.b16 %v161
    %v864 = vunpack.c.l.b16 %v162
    %v865 = vunpack.c.l.b16 %v163
    %v866 = vunpack.c.l.b16 %v164
    %v867 = vunpack.c.l.b16 %v165
    %v868 = vunpack.c.l.b16 %v166
    %v869 = vunpack.c.l.b16 %v167
    %v870 = vunpack.c.l.b16 %v168
    %v871 = vunpack.c.l.b16 %v169
    %v872 = vunpack.c.l.b16 %v170
    %v873 = vunpack.c.l.b16 %v171
    %v874 = vunpack.c.l.b16 %v172
    %v875 = vunpack.c.l.b16 %v173
    %v876 = vunpack.c.l.b16 %v174
    %v877 = vunpack.c.l.b16 %v175
    %v878 = vunpack.c.l.b16 %v176
    %v879 = vunpack.c.l.b16 %v177
    %v880 = vunpack.c.l.b16 %v178
    %v881 = vunpack.c.l.b16 %v179
    %v882 = vunpack.c.l.b16 %v180
    %v883 = vunpack.c.l.b16 %v181
    %v884 = vunpack.c.l.b16 %v182
    %v885 = vunpack.c.l.b16 %v183
    %v886 = vunpack.c.l.b16 %v184
    %v887 = vunpack.c.l.b16 %v185
    %v888 = vunpack.c.l.b16 %v186
    %v889 = vunpack.c.l.b16 %v187
    %v890 = vunpack.c.l.b16 %v188
    %v891 = vunpack.c.l.b16 %v189
    %v892 = vunpack.c.l.b16 %v190
    %v893 = vunpack.c.l.b16 %v191
    %v894 = vunpack.c.l.b16 %v192
    %v895 = vunpack.c.l.b16 %v193
    %v896 = vunpack.c.l.b16 %v194
    %v897 = vunpack.c.l.b16 %v195
    %v898 = vunpack.c.l.b16 %v196
    %v899 = vunpack.c.l.b16 %v197
    %v900 = vunpack.c.l.b16 %v198
    %v901 = vunpack.c.l.b16 %v199
    %v902 = vunpack.c.l.b16 %v200
    %v903 = vunpack.c.l.b16 %v201
    %v904 = vunpack.c.l.b16 %v202
    %v905 = vunpack.c.l.b16 %v203
    %v906 = vunpack.c.l.b16 %v204
    %v907 = vunpack.c.l.b16 %v205
    %v908 = vunpack.c.l.b16 %v206
    %v909 = vunpack.c.l.b16 %v207
    %v910 = vunpack.c.l.b16 %v208
    %v911 = vunpack.c.l.b16 %v209
    %v912 = vunpack.c.l.b16 %v210
    %v913 = vunpack.c.l.b16 %v211
    %v914 = vunpack.c.l.b16 %v212
    %v915 = vunpack.c.l.b16 %v213
    %v916 = vunpack.c.l.b16 %v214
    %v917 = vunpack.c.l.b16 %v215
    %v918 = vunpack.c.l.b16 %v216
    %v919 = vunpack.c.l.b16 %v217
    %v920 = vunpack.c.l.b16 %v218
    %v921 = vunpack.c.l.b16 %v219
    %v922 = vunpack.c.l.b16 %v220
    %v923 = vunpack.c.l.b16 %v221
    %v924 = vunpack.c.l.b16 %v222
    %v925 = vunpack.c.l.b16 %v223
    %v926 = vunpack.c.l.b16 %v224
    %v927 = vunpack.c.l.b16 %v225
    %v928 = vunpack.c.l.b16 %v226
    %v929 = vunpack.c.l.b16 %v227
    %v930 = vunpack.c.l.b16 %v228
    %v931 = vunpack.c.l.b16 %v229
    %v932 = vunpack.c.l.b16 %v230
    %v933 = vunpack.c.l.b16 %v231
    %v934 = vunpack.c.l.b16 %v232
    %v935 = vunpack.c.l.b16 %v233
    %v936 = vunpack.c.l.b16 %v234
    %v937 = vunpack.c.l.b16 %v235
    %v938 = vunpack.c.l.b16 %v236
    %v939 = vunpack.c.l.b16 %v237
    %v940 = vunpack.c.l.b16 %v238
    %v941 = vunpack.c.l.b16 %v239
    %v942 = vunpack.c.l.b16 %v240
    %v943 = vunpack.c.l.b16 %v241
    %v944 = vunpack.c.l.b16 %v242
    %v945 = vunpack.c.l.b16 %v243
    %v946 = vunpack.c.l.b16 %v244
    %v947 = vunpack.c.l.b16 %v245
    %v948 = vunpack.c.l.b16 %v246
    %v949 = vunpack.c.l.b16 %v247
    %v950 = vunpack.c.l.b16 %v248
    %v951 = vunpack.c.l.b16 %v249
    %v952 = vunpack.c.l.b16 %v250
    %v953 = vunpack.c.l.b16 %v251
    %v954 = vunpack.c.l.b16 %v252
    %v955 = vunpack.c.l.b16 %v253
    %v956 = vunpack.c.l.b16 %v254
    %v957 = vunpack.c.l.b16 %v255
    %v958 = vunpack.c.l.b16 %v256
    %v959 = vunpack.c.l.b16 %v257
    %v960 = vunpack.c.l.b16 %v258
    %v961 = vunpack.c.l.b16 %v259
    %v962 = vunpack.c.l.b16 %v260
    %v963 = vunpack.c.l.b16 %v261
    %v964 = vunpack.c.l.b16 %v262
    %v965 = vunpack.c.l.b16 %v263
    %v966 = vunpack.c.l.b16 %v264
    %v967 = vunpack.c.l.b16 %v265
    %v968 = vunpack.c.l.b16 %v266
    %v969 = vunpack.c.l.b16 %v267
    %v970 = vunpack.c.l.b16 %v268
    %v971 = vunpack.c.l.b16 %v269
    %v972 = vunpack.c.l.b16 %v270
    %v973 = vunpack.c.l.b16 %v271
    %v974 = vunpack.c.l.b16 %v272
    %v975 = vunpack.c.l.b16 %v273
    %v976 = vunpack.c.l.b16 %v274
    %v977 = vunpack.c.l.b16 %v275
    %v978 = vunpack.c.l.b16 %v276
    %v979 = vunpack.c.l.b16 %v277
    %v980 = vunpack.c.l.b16 %v278
    %v981 = vunpack.c.l.b16 %v279
    %v982 = vunpack.c.l.b16 %v280
    %v983 = vunpack.c.l.b16 %v281
    %v984 = vunpack.c.l.b16 %v282
    %v985 = vunpack.c.l.b16 %v283
    %v986 = vunpack.c.l.b16 %v284
    %v987 = vunpack.c.l.b16 %v285
    %v988 = vunpack.c.l.b16 %v286
    %v989 = vunpack.c.l.b16 %v287
    %v990 = vunpack.c.l.b16 %v288
    %v991 = vunpack.c.l.b16 %v289
    %v992 = vunpack.c.l.b16 %v290
    %v993 = vunpack.c.l.b16 %v291
    %v994 = vunpack.c.l.b16 %v292
    %v995 = vunpack.c.l.b16 %v293
    %v996 = vunpack.c.l.b16 %v294
    %v997 = vunpack.c.l.b16 %v295
    %v998 = vunpack.c.l.b16 %v296
    %v999 = vunpack.c.l.b16 %v297
    %v1000 = vunpack.c.l.b16 %v298
    %v1001 = vunpack.c.l.b16 %v299
    %v1002 = vunpack.c.l.b16 %v300
    %v1003 = vunpack.c.l.b16 %v301
    %v1004 = vunpack.c.l.b16 %v302
    %v1005 = vunpack.c.l.b16 %v303
    %v1006 = vunpack.c.l.b16 %v304
    %v1007 = vunpack.c.l.b16 %v305
    %v1008 = vunpack.c.l.b16 %v306
    %v1009 = vunpack.c.l.b16 %v307
    %v1010 = vunpack.c.l.b16 %v308
    %v1011 = vunpack.c.l.b16 %v309
    %v1012 = vunpack.c.l.b16 %v310
    %v1013 = vunpack.c.l.b16 %v311
    %v1014 = vunpack.c.l.b16 %v312
    %v1015 = vunpack.c.l.b16 %v313
    %v1016 = vunpack.c.l.b16 %v314
    %v1017 = vunpack.c.l.b16 %v315
    %v1018 = vunpack.c.l.b16 %v316
    %v1019 = vunpack.c.l.b16 %v317
    %v1020 = vunpack.c.l.b16 %v318
    %v1021 = vunpack.c.l.b16 %v319
    %v1022 = vunpack.c.l.b16 %v320
    %v1023 = vunpack.c.l.b16 %v321
    %v1024 = vunpack.c.l.b16 %v322
    %v1025 = vunpack.c.l.b16 %v323
    %v1026 = vunpack.c.l.b16 %v324
    %v1027 = vunpack.c.l.b16 %v325
    %v1028 = vunpack.c.l.b16 %v326
    %v1029 = vunpack.c.l.b16 %v327
    %v1030 = vunpack.c.l.b16 %v328
    %v1031 = vunpack.c.l.b16 %v329
    %v1032 = vunpack.c.l.b16 %v330
    %v1033 = vunpack.c.l.b16 %v331
    %v1034 = vunpack.c.l.b16 %v332
    %v1035 = vunpack.c.l.b16 %v333
    %v1036 = vunpack.c.l.b16 %v334
    %v1037 = vunpack.c.l.b16 %v335
    %v1038 = vunpack.c.l.b16 %v336
    %v1039 = vunpack.c.l.b16 %v337
    %v1040 = vunpack.c.l.b16 %v338
    %v1041 = vunpack.c.l.b16 %v339
    %v1042 = vunpack.c.l.b16 %v340
    %v1043 = vunpack.c.l.b16 %v341
    %v1044 = vunpack.c.l.b16 %v342
    %v1045 = vunpack.c.l.b16 %v343
    %v1046 = vunpack.c.l.b16 %v344
    %v1047 = vunpack.c.l.b16 %v345
    %v1048 = vunpack.c.l.b16 %v346
    %v1049 = vunpack.c.l.b16 %v347
    %v1050 = vunpack.c.l.b16 %v348
    %v1051 = vunpack.c.l.b16 %v349
    %v1052 = vunpack.c.l.b16 %v350
    %v1053 = vunpack.c.l.b16 %v351
    %v1054 = vunpack.c.l.b16 %v352
    %v1055 = vunpack.c.l.b16 %v353
    %v1056 = vunpack.c.l.b16 %v354
    %v1057 = vunpack.c.l.b16 %v355
    %v1058 = vunpack.c.l.b16 %v356
    %v1059 = vunpack.c.l.b16 %v357
    %v1060 = vunpack.c.l.b16 %v358
    %v1061 = vunpack.c.l.b16 %v359
    %v1062 = vunpack.c.l.b16 %v360
    %v1063 = vunpack.c.l.b16 %v361
    %v1064 = vunpack.c.l.b16 %v362
    %v1065 = vunpack.c.l.b16 %v363
    %v1066 = vpack.c.b16 %v767, %v766
    %v1067 = vpack.c.b16 %v769, %v768
    %v1068 = vpack.c.b16 %v771, %v770
    %v1069 = vpack.c.b16 %v773, %v772
    %v1070 = vpack.c.b16 %v775, %v774
    %v1071 = vpack.c.b16 %v777, %v776
    %v1072 = vpack.c.b16 %v779, %v778
    %v1073 = vpack.c.b16 %v781, %v780
    %v1074 = vpack.c.b16 %v783, %v782
    %v1075 = vpack.c.b16 %v785, %v784
    %v1076 = vpack.c.b16 %v787, %v786
    %v1077 = vpack.c.b16 %v789, %v788
    %v1078 = vpack.c.b16 %v791, %v790
    %v1079 = vpack.c.b16 %v793, %v792
    %v1080 = vpack.c.b16 %v795, %v794
    %v1081 = vpack.c.b16 %v797, %v796
    %v1082 = vpack.c.b16 %v799, %v798
    %v1083 = vpack.c.b16 %v801, %v800
    %v1084 = vpack.c.b16 %v803, %v802
    %v1085 = vpack.c.b16 %v805, %v804
    %v1086 = vpack.c.b16 %v807, %v806
    %v1087 = vpack.c.b16 %v809, %v808
    %v1088 = vpack.c.b16 %v811, %v810
    %v1089 = vpack.c.b16 %v813, %v812
    %v1090 = vpack.c.b16 %v815, %v814
    %v1091 = vpack.c.b16 %v817, %v816
    %v1092 = vpack.c.b16 %v819, %v818
    %v1093 = vpack.c.b16 %v821, %v820
    %v1094 = vpack.c.b16 %v823, %v822
    %v1095 = vpack.c.b16 %v825, %v824
    %v1096 = vpack.c.b16 %v827, %v826
    %v1097 = vpack.c.b16 %v829, %v828
    %v1098 = vpack.c.b16 %v831, %v830
    %v1099 = vpack.c.b16 %v833, %v832
    %v1100 = vpack.c.b16 %v835, %v834
    %v1101 = vpack.c.b16 %v837, %v836
    %v1102 = vpack.c.b16 %v839, %v838
    %v1103 = vpack.c.b16 %v841, %v840
    %v1104 = vpack.c.b16 %v843, %v842
    %v1105 = vpack.c.b16 %v845, %v844
    %v1106 = vpack.c.b16 %v847, %v846
    %v1107 = vpack.c.b16 %v849, %v848
    %v1108 = vpack.c.b16 %v851, %v850
    %v1109 = vpack.c.b16 %v853, %v852
    %v1110 = vpack.c.b16 %v855, %v854
    %v1111 = vpack.c.b16 %v857, %v856
    %v1112 = vpack.c.b16 %v859, %v858
    %v1113 = vpack.c.b16 %v861, %v860
    %v1114 = vpack.c.b16 %v863, %v862
    %v1115 = vpack.c.b16 %v865, %v864
    %v1116 = vpack.c.b16 %v867, %v866
    %v1117 = vpack.c.b16 %v869, %v868
    %v1118 = vpack.c.b16 %v871, %v870
    %v1119 = vpack.c.b16 %v873, %v872
    %v1120 = vpack.c.b16 %v875, %v874
    %v1121 = vpack.c.b16 %v877, %v876
    %v1122 = vpack.c.b16 %v879, %v878
    %v1123 = vpack.c.b16 %v881, %v880
    %v1124 = vpack.c.b16 %v883, %v882
    %v1125 = vpack.c.b16 %v885, %v884
    %v1126 = vpack.c.b16 %v887, %v886
    %v1127 = vpack.c.b16 %v889, %v888
    %v1128 = vpack.c.b16 %v891, %v890
    %v1129 = vpack.c.b16 %v893, %v892
    %v1130 = vpack.c.b16 %v895, %v894
    %v1131 = vpack.c.b16 %v897, %v896
    %v1132 = vpack.c.b16 %v899, %v898
    %v1133 = vpack.c.b16 %v901, %v900
    %v1134 = vpack.c.b16 %v903, %v902
    %v1135 = vpack.c.b16 %v905, %v904
    %v1136 = vpack.c.b16 %v907, %v906
    %v1137 = vpack.c.b16 %v909, %v908
    %v1138 = vpack.c.b16 %v911, %v910
    %v1139 = vpack.c.b16 %v913, %v912
    %v1140 = vpack.c.b16 %v915, %v914
    %v1141 = vpack.c.b16 %v917, %v916
    %v1142 = vpack.c.b16 %v919, %v918
    %v1143 = vpack.c.b16 %v921, %v920
    %v1144 = vpack.c.b16 %v923, %v922
    %v1145 = vpack.c.b16 %v925, %v924
    %v1146 = vpack.c.b16 %v927, %v926
    %v1147 = vpack.c.b16 %v929, %v928
    %v1148 = vpack.c.b16 %v931, %v930
    %v1149 = vpack.c.b16 %v933, %v932
    %v1150 = vpack.c.b16 %v935, %v934
    %v1151 = vpack.c.b16 %v937, %v936
    %v1152 = vpack.c.b16 %v939, %v938
    %v1153 = vpack.c.b16 %v941, %v940
    %v1154 = vpack.c.b16 %v943, %v942
    %v1155 = vpack.c.b16 %v945, %v944
    %v1156 = vpack.c.b16 %v947, %v946
    %v1157 = vpack.c.b16 %v949, %v948
    %v1158 = vpack.c.b16 %v951, %v950
    %v1159 = vpack.c.b16 %v953, %v952
    %v1160 = vpack.c.b16 %v955, %v954
    %v1161 = vpack.c.b16 %v957, %v956
    %v1162 = vpack.c.b16 %v959, %v958
    %v1163 = vpack.c.b16 %v961, %v960
    %v1164 = vpack.c.b16 %v963, %v962
    %v1165 = vpack.c.b16 %v965, %v964
    %v1166 = vpack.c.b16 %v967, %v966
    %v1167 = vpack.c.b16 %v969, %v968
    %v1168 = vpack.c.b16 %v971, %v970
    %v1169 = vpack.c.b16 %v973, %v972
    %v1170 = vpack.c.b16 %v975, %v974
    %v1171 = vpack.c.b16 %v977, %v976
    %v1172 = vpack.c.b16 %v979, %v978
    %v1173 = vpack.c.b16 %v981, %v980
    %v1174 = vpack.c.b16 %v983, %v982
    %v1175 = vpack.c.b16 %v985, %v984
    %v1176 = vpack.c.b16 %v987, %v986
    %v1177 = vpack.c.b16 %v989, %v988
    %v1178 = vpack.c.b16 %v991, %v990
    %v1179 = vpack.c.b16 %v993, %v992
    %v1180 = vpack.c.b16 %v995, %v994
    %v1181 = vpack.c.b16 %v997, %v996
    %v1182 = vpack.c.b16 %v999, %v998
    %v1183 = vpack.c.b16 %v1001, %v1000
    %v1184 = vpack.c.b16 %v1003, %v1002
    %v1185 = vpack.c.b16 %v1005, %v1004
    %v1186 = vpack.c.b16 %v1007, %v1006
    %v1187 = vpack.c.b16 %v1009, %v1008
    %v1188 = vpack.c.b16 %v1011, %v1010
    %v1189 = vpack.c.b16 %v1013, %v1012
    %v1190 = vpack.c.b16 %v1015, %v1014
    %v1191 = vpack.c.b16 %v1017, %v1016
    %v1192 = vpack.c.b16 %v1019, %v1018
    %v1193 = vpack.c.b16 %v1021, %v1020
    %v1194 = vpack.c.b16 %v1023, %v1022
    %v1195 = vpack.c.b16 %v1025, %v1024
    %v1196 = vpack.c.b16 %v1027, %v1026
    %v1197 = vpack.c.b16 %v1029, %v1028
    %v1198 = vpack.c.b16 %v1031, %v1030
    %v1199 = vpack.c.b16 %v1033, %v1032
    %v1200 = vpack.c.b16 %v1035, %v1034
    %v1201 = vpack.c.b16 %v1037, %v1036
    %v1202 = vpack.c.b16 %v1039, %v1038
    %v1203 = vpack.c.b16 %v1041, %v1040
    %v1204 = vpack.c.b16 %v1043, %v1042
    %v1205 = vpack.c.b16 %v1045, %v1044
    %v1206 = vpack.c.b16 %v1047, %v1046
    %v1207 = vpack.c.b16 %v1049, %v1048
    %v1208 = vpack.c.b16 %v1051, %v1050
    %v1209 = vpack.c.b16 %v1053, %v1052
    %v1210 = vpack.c.b16 %v1055, %v1054
    %v1211 = vpack.c.b16 %v1057, %v1056
    %v1212 = vpack.c.b16 %v1059, %v1058
    %v1213 = vpack.c.b16 %v1061, %v1060
    %v1214 = vpack.c.b16 %v1063, %v1062
    %v1215 = vpack.c.b16 %v1065, %v1064
    %vm1366 = vcmask 785408
    %v1368 = vsel %vm1366, %v447, 0
    %1370 = vmatprep.subr.bf16.mxu0 0
    %1371 = vmatpush1.bf16.msra.mxu0 %v1066
    %1372 = vmatprep.subr.bf16.mxu0 0
    %1373 = vmatpush1.bf16.msra.mxu0 %v1067
    %1374 = vmatprep.subr.bf16.mxu0 0
    %1375 = vmatpush1.bf16.msra.mxu0 %v1068
    %1376 = vmatprep.subr.bf16.mxu0 0
    %1377 = vmatpush1.bf16.msra.mxu0 %v1069
    %1378 = vmatprep.subr.bf16.mxu0 0
    %1379 = vmatpush1.bf16.msra.mxu0 %v1070
    %1380 = vmatprep.subr.bf16.mxu0 0
    %1381 = vmatpush1.bf16.msra.mxu0 %v1071
    %1382 = vmatprep.subr.bf16.mxu0 0
    %1383 = vmatpush1.bf16.msra.mxu0 %v1072
    %1384 = vmatprep.subr.bf16.mxu0 0
    %1385 = vmatpush1.bf16.msra.mxu0 %v1073
    %1386 = vmatprep.subr.bf16.mxu0 0
    %1387 = vmatpush1.bf16.msra.mxu0 %v1074
    %1388 = vmatprep.subr.bf16.mxu0 0
    %1389 = vmatpush1.bf16.msra.mxu0 %v1075
    %1390 = vmatprep.subr.bf16.mxu0 0
    %1391 = vmatpush1.bf16.msra.mxu0 %v1076
    %1392 = vmatprep.subr.bf16.mxu0 0
    %1393 = vmatpush1.bf16.msra.mxu0 %v1077
    %1394 = vmatprep.subr.bf16.mxu0 0
    %1395 = vmatpush1.bf16.msra.mxu0 %v1078
    %1396 = vmatprep.subr.bf16.mxu0 0
    %1397 = vmatpush1.bf16.msra.mxu0 %v1079
    %1398 = vmatprep.subr.bf16.mxu0 0
    %1399 = vmatpush1.bf16.msra.mxu0 %v1080
    %1400 = vmatprep.subr.bf16.mxu0 0
    %1401 = vmatpush1.bf16.msra.mxu0 %v1081
    %1402 = vmatprep.mubr.bf16.mxu0 %v430
    %1403 = vmatmul.mubr.bf16.gmra.mrb[0].mxu0 %v429
    %v1404 = vpop.f32.mrb[0].mxu0
    %v1405 = vadd.f32 %v369, %v1404
    %v1406 = vpop.f32.mrb[0].mxu0
    %v1407 = vpop.f32.mrb[0].mxu0
    %v1408 = vadd.f32 %v369, %v1407
    %v1409 = vpop.f32.mrb[0].mxu0
    %1410 = vdwg.mxu0
    %1411 = vmatprep.subr.bf16.mxu0 0
    %1412 = vmatpush1.bf16.msra.mxu0 %v1082
    %1413 = vmatprep.subr.bf16.mxu0 0
    %1414 = vmatpush1.bf16.msra.mxu0 %v1083
    %1415 = vmatprep.subr.bf16.mxu0 0
    %1416 = vmatpush1.bf16.msra.mxu0 %v1084
    %1417 = vmatprep.subr.bf16.mxu0 0
    %1418 = vmatpush1.bf16.msra.mxu0 %v1085
    %1419 = vmatprep.subr.bf16.mxu0 0
    %1420 = vmatpush1.bf16.msra.mxu0 %v1086
    %1421 = vmatprep.subr.bf16.mxu0 0
    %1422 = vmatpush1.bf16.msra.mxu0 %v1087
    %1423 = vmatprep.subr.bf16.mxu0 0
    %1424 = vmatpush1.bf16.msra.mxu0 %v1088
    %1425 = vmatprep.subr.bf16.mxu0 0
    %1426 = vmatpush1.bf16.msra.mxu0 %v1089
    %1427 = vmatprep.subr.bf16.mxu0 0
    %1428 = vmatpush1.bf16.msra.mxu0 %v1090
    %1429 = vmatprep.subr.bf16.mxu0 0
    %1430 = vmatpush1.bf16.msra.mxu0 %v1091
    %1431 = vmatprep.subr.bf16.mxu0 0
    %1432 = vmatpush1.bf16.msra.mxu0 %v1092
    %1433 = vmatprep.subr.bf16.mxu0 0
    %1434 = vmatpush1.bf16.msra.mxu0 %v1093
    %1435 = vmatprep.subr.bf16.mxu0 0
    %1436 = vmatpush1.bf16.msra.mxu0 %v1094
    %1437 = vmatprep.subr.bf16.mxu0 0
    %1438 = vmatpush1.bf16.msra.mxu0 %v1095
    %1439 = vmatprep.subr.bf16.mxu0 0
    %1440 = vmatpush1.bf16.msra.mxu0 %v1096
    %1441 = vmatprep.subr.bf16.mxu0 0
    %1442 = vmatpush1.bf16.msra.mxu0 %v1097
    %1443 = vmatprep.mubr.bf16.mxu0 %v432
    %1444 = vmatmul.mubr.bf16.gmra.mrb[0].mxu0 %v431
    %v1445 = vpop.f32.mrb[0].mxu0
    %v1446 = vadd.f32 %v1405, %v1445
    %v1447 = vpop.f32.mrb[0].mxu0
    %v1448 = vpop.f32.mrb[0].mxu0
    %v1449 = vadd.f32 %v1408, %v1448
    %v1450 = vpop.f32.mrb[0].mxu0
    %1451 = vdwg.mxu0
    %1452 = vmatprep.subr.bf16.mxu0 0
    %1453 = vmatpush1.bf16.msra.mxu0 %v1098
    %1454 = vmatprep.subr.bf16.mxu0 0
    %1455 = vmatpush1.bf16.msra.mxu0 %v1099
    %1456 = vmatprep.subr.bf16.mxu0 0
    %1457 = vmatpush1.bf16.msra.mxu0 %v1100
    %1458 = vmatprep.subr.bf16.mxu0 0
    %1459 = vmatpush1.bf16.msra.mxu0 %v1101
    %1460 = vmatprep.subr.bf16.mxu0 0
    %1461 = vmatpush1.bf16.msra.mxu0 %v1102
    %1462 = vmatprep.subr.bf16.mxu0 0
    %1463 = vmatpush1.bf16.msra.mxu0 %v1103
    %1464 = vmatprep.subr.bf16.mxu0 0
    %1465 = vmatpush1.bf16.msra.mxu0 %v1104
    %1466 = vmatprep.subr.bf16.mxu0 0
    %1467 = vmatpush1.bf16.msra.mxu0 %v1105
    %1468 = vmatprep.subr.bf16.mxu0 0
    %1469 = vmatpush1.bf16.msra.mxu0 %v1106
    %1470 = vmatprep.subr.bf16.mxu0 0
    %1471 = vmatpush1.bf16.msra.mxu0 %v1107
    %1472 = vmatprep.subr.bf16.mxu0 0
    %1473 = vmatpush1.bf16.msra.mxu0 %v1108
    %1474 = vmatprep.subr.bf16.mxu0 0
    %1475 = vmatpush1.bf16.msra.mxu0 %v1109
    %1476 = vmatprep.subr.bf16.mxu0 0
    %1477 = vmatpush1.bf16.msra.mxu0 %v1110
    %1478 = vmatprep.subr.bf16.mxu0 0
    %1479 = vmatpush1.bf16.msra.mxu0 %v1111
    %1480 = vmatprep.subr.bf16.mxu0 0
    %1481 = vmatpush1.bf16.msra.mxu0 %v1112
    %1482 = vmatprep.subr.bf16.mxu0 0
    %1483 = vmatpush1.bf16.msra.mxu0 %v1113
    %1484 = vmatprep.mubr.bf16.mxu0 %v434
    %1485 = vmatmul.mubr.bf16.gmra.mrb[0].mxu0 %v433
    %v1486 = vpop.f32.mrb[0].mxu0
    %v1487 = vadd.f32 %v1446, %v1486
    %v1488 = vpop.f32.mrb[0].mxu0
    %v1489 = vpop.f32.mrb[0].mxu0
    %v1490 = vadd.f32 %v1449, %v1489
    %v1491 = vpop.f32.mrb[0].mxu0
    %1492 = vdwg.mxu0
    %1493 = vmatprep.subr.bf16.mxu0 0
    %1494 = vmatpush1.bf16.msra.mxu0 %v1114
    %1495 = vmatprep.subr.bf16.mxu0 0
    %1496 = vmatpush1.bf16.msra.mxu0 %v1115
    %1497 = vmatprep.subr.bf16.mxu0 0
    %1498 = vmatpush1.bf16.msra.mxu0 %v1116
    %1499 = vmatprep.subr.bf16.mxu0 0
    %1500 = vmatpush1.bf16.msra.mxu0 %v1117
    %1501 = vmatprep.subr.bf16.mxu0 0
    %1502 = vmatpush1.bf16.msra.mxu0 %v1118
    %1503 = vmatprep.subr.bf16.mxu0 0
    %1504 = vmatpush1.bf16.msra.mxu0 %v1119
    %1505 = vmatprep.subr.bf16.mxu0 0
    %1506 = vmatpush1.bf16.msra.mxu0 %v1120
    %1507 = vmatprep.subr.bf16.mxu0 0
    %1508 = vmatpush1.bf16.msra.mxu0 %v1121
    %1509 = vmatprep.subr.bf16.mxu0 0
    %1510 = vmatpush1.bf16.msra.mxu0 %v1122
    %1511 = vmatprep.subr.bf16.mxu0 0
    %1512 = vmatpush1.bf16.msra.mxu0 %v1123
    %1513 = vmatprep.subr.bf16.mxu0 0
    %1514 = vmatpush1.bf16.msra.mxu0 %v1124
    %1515 = vmatprep.subr.bf16.mxu0 0
    %1516 = vmatpush1.bf16.msra.mxu0 %v1125
    %1517 = vmatprep.subr.bf16.mxu0 0
    %1518 = vmatpush1.bf16.msra.mxu0 %v1126
    %1519 = vmatprep.subr.bf16.mxu0 0
    %1520 = vmatpush1.bf16.msra.mxu0 %v1127
    %1521 = vmatprep.subr.bf16.mxu0 0
    %1522 = vmatpush1.bf16.msra.mxu0 %v1128
    %1523 = vmatprep.subr.bf16.mxu0 0
    %1524 = vmatpush1.bf16.msra.mxu0 %v1129
    %1525 = vmatprep.mubr.bf16.mxu0 %v436
    %1526 = vmatmul.mubr.bf16.gmra.mrb[0].mxu0 %v435
    %v1527 = vpop.f32.mrb[0].mxu0
    %v1528 = vadd.f32 %v1487, %v1527
    %v1529 = vpop.f32.mrb[0].mxu0
    %v1530 = vpop.f32.mrb[0].mxu0
    %v1531 = vadd.f32 %v1490, %v1530
    %v1532 = vpop.f32.mrb[0].mxu0
    %1533 = vdwg.mxu0
    %1534 = vmatprep.subr.bf16.mxu0 0
    %1535 = vmatpush1.bf16.msra.mxu0 %v1130
    %1536 = vmatprep.subr.bf16.mxu0 0
    %1537 = vmatpush1.bf16.msra.mxu0 %v1131
    %1538 = vmatprep.subr.bf16.mxu0 0
    %1539 = vmatpush1.bf16.msra.mxu0 %v1132
    %1540 = vmatprep.subr.bf16.mxu0 0
    %1541 = vmatpush1.bf16.msra.mxu0 %v1133
    %1542 = vmatprep.subr.bf16.mxu0 0
    %1543 = vmatpush1.bf16.msra.mxu0 %v1134
    %1544 = vmatprep.subr.bf16.mxu0 0
    %1545 = vmatpush1.bf16.msra.mxu0 %v1135
    %1546 = vmatprep.subr.bf16.mxu0 0
    %1547 = vmatpush1.bf16.msra.mxu0 %v1136
    %1548 = vmatprep.subr.bf16.mxu0 0
    %1549 = vmatpush1.bf16.msra.mxu0 %v1137
    %1550 = vmatprep.subr.bf16.mxu0 0
    %1551 = vmatpush1.bf16.msra.mxu0 %v1138
    %1552 = vmatprep.subr.bf16.mxu0 0
    %1553 = vmatpush1.bf16.msra.mxu0 %v1139
    %1554 = vmatprep.subr.bf16.mxu0 0
    %1555 = vmatpush1.bf16.msra.mxu0 %v1140
    %1556 = vmatprep.subr.bf16.mxu0 0
    %1557 = vmatpush1.bf16.msra.mxu0 %v1141
    %1558 = vmatprep.subr.bf16.mxu0 0
    %1559 = vmatpush1.bf16.msra.mxu0 %v1142
    %1560 = vmatprep.subr.bf16.mxu0 0
    %1561 = vmatpush1.bf16.msra.mxu0 %v1143
    %1562 = vmatprep.subr.bf16.mxu0 0
    %1563 = vmatpush1.bf16.msra.mxu0 %v1144
    %1564 = vmatprep.subr.bf16.mxu0 0
    %1565 = vmatpush1.bf16.msra.mxu0 %v1145
    %1566 = vmatprep.mubr.bf16.mxu0 %v438
    %1567 = vmatmul.mubr.bf16.gmra.mrb[0].mxu0 %v437
    %v1568 = vpop.f32.mrb[0].mxu0
    %v1569 = vadd.f32 %v1528, %v1568
    %v1570 = vpop.f32.mrb[0].mxu0
    %v1571 = vpop.f32.mrb[0].mxu0
    %v1572 = vadd.f32 %v1531, %v1571
    %v1573 = vpop.f32.mrb[0].mxu0
    %1574 = vdwg.mxu0
    %1575 = vmatprep.subr.bf16.mxu0 0
    %1576 = vmatpush1.bf16.msra.mxu0 %v1146
    %1577 = vmatprep.subr.bf16.mxu0 0
    %1578 = vmatpush1.bf16.msra.mxu0 %v1147
    %1579 = vmatprep.subr.bf16.mxu0 0
    %1580 = vmatpush1.bf16.msra.mxu0 %v1148
    %1581 = vmatprep.subr.bf16.mxu0 0
    %1582 = vmatpush1.bf16.msra.mxu0 %v1149
    %1583 = vmatprep.subr.bf16.mxu0 0
    %1584 = vmatpush1.bf16.msra.mxu0 %v1150
    %1585 = vmatprep.subr.bf16.mxu0 0
    %1586 = vmatpush1.bf16.msra.mxu0 %v1151
    %1587 = vmatprep.subr.bf16.mxu0 0
    %1588 = vmatpush1.bf16.msra.mxu0 %v1152
    %1589 = vmatprep.subr.bf16.mxu0 0
    %1590 = vmatpush1.bf16.msra.mxu0 %v1153
    %1591 = vmatprep.subr.bf16.mxu0 0
    %1592 = vmatpush1.bf16.msra.mxu0 %v1154
    %1593 = vmatprep.subr.bf16.mxu0 0
    %1594 = vmatpush1.bf16.msra.mxu0 %v1155
    %1595 = vmatprep.subr.bf16.mxu0 0
    %1596 = vmatpush1.bf16.msra.mxu0 %v1156
    %1597 = vmatprep.subr.bf16.mxu0 0
    %1598 = vmatpush1.bf16.msra.mxu0 %v1157
    %1599 = vmatprep.subr.bf16.mxu0 0
    %1600 = vmatpush1.bf16.msra.mxu0 %v1158
    %1601 = vmatprep.subr.bf16.mxu0 0
    %1602 = vmatpush1.bf16.msra.mxu0 %v1159
    %1603 = vmatprep.subr.bf16.mxu0 0
    %1604 = vmatpush1.bf16.msra.mxu0 %v1160
    %1605 = vmatprep.subr.bf16.mxu0 0
    %1606 = vmatpush1.bf16.msra.mxu0 %v1161
    %1607 = vmatprep.mubr.bf16.mxu0 %v440
    %1608 = vmatmul.mubr.bf16.gmra.mrb[0].mxu0 %v439
    %v1609 = vpop.f32.mrb[0].mxu0
    %v1610 = vadd.f32 %v1569, %v1609
    %v1611 = vpop.f32.mrb[0].mxu0
    %v1612 = vpop.f32.mrb[0].mxu0
    %v1613 = vadd.f32 %v1572, %v1612
    %v1614 = vpop.f32.mrb[0].mxu0
    %1615 = vdwg.mxu0
    %1616 = vmatprep.subr.bf16.mxu0 0
    %1617 = vmatpush1.bf16.msra.mxu0 %v1162
    %1618 = vmatprep.subr.bf16.mxu0 0
    %1619 = vmatpush1.bf16.msra.mxu0 %v1163
    %1620 = vmatprep.subr.bf16.mxu0 0
    %1621 = vmatpush1.bf16.msra.mxu0 %v1164
    %1622 = vmatprep.subr.bf16.mxu0 0
    %1623 = vmatpush1.bf16.msra.mxu0 %v1165
    %1624 = vmatprep.subr.bf16.mxu0 0
    %1625 = vmatpush1.bf16.msra.mxu0 %v1166
    %1626 = vmatprep.subr.bf16.mxu0 0
    %1627 = vmatpush1.bf16.msra.mxu0 %v1167
    %1628 = vmatprep.subr.bf16.mxu0 0
    %1629 = vmatpush1.bf16.msra.mxu0 %v1168
    %1630 = vmatprep.subr.bf16.mxu0 0
    %1631 = vmatpush1.bf16.msra.mxu0 %v1169
    %1632 = vmatprep.subr.bf16.mxu0 0
    %1633 = vmatpush1.bf16.msra.mxu0 %v1170
    %1634 = vmatprep.subr.bf16.mxu0 0
    %1635 = vmatpush1.bf16.msra.mxu0 %v1171
    %1636 = vmatprep.subr.bf16.mxu0 0
    %1637 = vmatpush1.bf16.msra.mxu0 %v1172
    %1638 = vmatprep.subr.bf16.mxu0 0
    %1639 = vmatpush1.bf16.msra.mxu0 %v1173
    %1640 = vmatprep.subr.bf16.mxu0 0
    %1641 = vmatpush1.bf16.msra.mxu0 %v1174
    %1642 = vmatprep.subr.bf16.mxu0 0
    %1643 = vmatpush1.bf16.msra.mxu0 %v1175
    %1644 = vmatprep.subr.bf16.mxu0 0
    %1645 = vmatpush1.bf16.msra.mxu0 %v1176
    %1646 = vmatprep.subr.bf16.mxu0 0
    %1647 = vmatpush1.bf16.msra.mxu0 %v1177
    %1648 = vmatprep.mubr.bf16.mxu0 %v442
    %1649 = vmatmul.mubr.bf16.gmra.mrb[0].mxu0 %v441
    %v1650 = vpop.f32.mrb[0].mxu0
    %v1651 = vadd.f32 %v1610, %v1650
    %v1652 = vpop.f32.mrb[0].mxu0
    %v1653 = vpop.f32.mrb[0].mxu0
    %v1654 = vadd.f32 %v1613, %v1653
    %v1655 = vpop.f32.mrb[0].mxu0
    %1656 = vdwg.mxu0
    %1657 = vmatprep.subr.bf16.mxu0 0
    %1658 = vmatpush1.bf16.msra.mxu0 %v1178
    %1659 = vmatprep.subr.bf16.mxu0 0
    %1660 = vmatpush1.bf16.msra.mxu0 %v1179
    %1661 = vmatprep.subr.bf16.mxu0 0
    %1662 = vmatpush1.bf16.msra.mxu0 %v1180
    %1663 = vmatprep.subr.bf16.mxu0 0
    %1664 = vmatpush1.bf16.msra.mxu0 %v1181
    %1665 = vmatprep.subr.bf16.mxu0 0
    %1666 = vmatpush1.bf16.msra.mxu0 %v1182
    %1667 = vmatprep.subr.bf16.mxu0 0
    %1668 = vmatpush1.bf16.msra.mxu0 %v1183
    %1669 = vmatprep.subr.bf16.mxu0 0
    %1670 = vmatpush1.bf16.msra.mxu0 %v1184
    %1671 = vmatprep.subr.bf16.mxu0 0
    %1672 = vmatpush1.bf16.msra.mxu0 %v1185
    %1673 = vmatprep.subr.bf16.mxu0 0
    %1674 = vmatpush1.bf16.msra.mxu0 %v1186
    %1675 = vmatprep.subr.bf16.mxu0 0
    %1676 = vmatpush1.bf16.msra.mxu0 %v1187
    %1677 = vmatprep.subr.bf16.mxu0 0
    %1678 = vmatpush1.bf16.msra.mxu0 %v1188
    %1679 = vmatprep.subr.bf16.mxu0 0
    %1680 = vmatpush1.bf16.msra.mxu0 %v1189
    %1681 = vmatprep.subr.bf16.mxu0 0
    %1682 = vmatpush1.bf16.msra.mxu0 %v1190
    %1683 = vmatprep.subr.bf16.mxu0 0
    %1684 = vmatpush1.bf16.msra.mxu0 %v1191
    %1685 = vmatprep.subr.bf16.mxu0 0
    %1686 = vmatpush1.bf16.msra.mxu0 %v1192
    %1687 = vmatprep.subr.bf16.mxu0 0
    %1688 = vmatpush1.bf16.msra.mxu0 %v1193
    %1689 = vmatprep.mubr.bf16.mxu0 %v444
    %1690 = vmatmul.mubr.bf16.gmra.mrb[0].mxu0 %v443
    %v1691 = vpop.f32.mrb[0].mxu0
    %v1692 = vadd.f32 %v1651, %v1691
    %v1693 = vpop.f32.mrb[0].mxu0
    %v1694 = vpop.f32.mrb[0].mxu0
    %v1695 = vadd.f32 %v1654, %v1694
    %v1696 = vpop.f32.mrb[0].mxu0
    %1697 = vdwg.mxu0
    %1698 = vmatprep.subr.bf16.mxu0 0
    %1699 = vmatpush1.bf16.msra.mxu0 %v1194
    %1700 = vmatprep.subr.bf16.mxu0 0
    %1701 = vmatpush1.bf16.msra.mxu0 %v1195
    %1702 = vmatprep.subr.bf16.mxu0 0
    %1703 = vmatpush1.bf16.msra.mxu0 %v1196
    %1704 = vmatprep.subr.bf16.mxu0 0
    %1705 = vmatpush1.bf16.msra.mxu0 %v1197
    %1706 = vmatprep.subr.bf16.mxu0 0
    %1707 = vmatpush1.bf16.msra.mxu0 %v1198
    %1708 = vmatprep.subr.bf16.mxu0 0
    %1709 = vmatpush1.bf16.msra.mxu0 %v1199
    %1710 = vmatprep.subr.bf16.mxu0 0
    %1711 = vmatpush1.bf16.msra.mxu0 %v1200
    %1712 = vmatprep.subr.bf16.mxu0 0
    %1713 = vmatpush1.bf16.msra.mxu0 %v1201
    %1714 = vmatprep.subr.bf16.mxu0 0
    %1715 = vmatpush1.bf16.msra.mxu0 %v1202
    %1716 = vmatprep.subr.bf16.mxu0 0
    %1717 = vmatpush1.bf16.msra.mxu0 %v1203
    %1718 = vmatprep.subr.bf16.mxu0 0
    %1719 = vmatpush1.bf16.msra.mxu0 %v1204
    %1720 = vmatprep.subr.bf16.mxu0 0
    %1721 = vmatpush1.bf16.msra.mxu0 %v1205
    %1722 = vmatprep.subr.bf16.mxu0 0
    %1723 = vmatpush1.bf16.msra.mxu0 %v1206
    %1724 = vmatprep.subr.bf16.mxu0 0
    %1725 = vmatpush1.bf16.msra.mxu0 %v1207
    %1726 = vmatprep.subr.bf16.mxu0 0
    %1727 = vmatpush1.bf16.msra.mxu0 %v1208
    %1728 = vmatprep.subr.bf16.mxu0 0
    %1729 = vmatpush1.bf16.msra.mxu0 %v1209
    %1730 = vmatprep.mubr.bf16.mxu0 %v446
    %1731 = vmatmul.mubr.bf16.gmra.mrb[0].mxu0 %v445
    %v1732 = vpop.f32.mrb[0].mxu0
    %v1733 = vadd.f32 %v1692, %v1732
    %v1734 = vpop.f32.mrb[0].mxu0
    %v1735 = vpop.f32.mrb[0].mxu0
    %v1736 = vadd.f32 %v1695, %v1735
    %v1737 = vpop.f32.mrb[0].mxu0
    %1738 = vdwg.mxu0
    %1739 = vmatprep.subr.bf16.mxu0 0
    %1740 = vmatpush1.bf16.msra.mxu0 %v1210
    %1741 = vmatprep.subr.bf16.mxu0 0
    %1742 = vmatpush1.bf16.msra.mxu0 %v1211
    %1743 = vmatprep.subr.bf16.mxu0 0
    %1744 = vmatpush1.bf16.msra.mxu0 %v1212
    %1745 = vmatprep.subr.bf16.mxu0 0
    %1746 = vmatpush1.bf16.msra.mxu0 %v1213
    %1747 = vmatprep.subr.bf16.mxu0 0
    %1748 = vmatpush1.bf16.msra.mxu0 %v1214
    %1749 = vmatprep.subr.bf16.mxu0 0
    %1750 = vmatpush1.bf16.msra.mxu0 %v1215
    %1751 = vmatprep.subr.bf16.mxu0 0
    %1752 = vmatpush1.bf16.msra.mxu0 0
    %1753 = vmatprep.subr.bf16.mxu0 0
    %1754 = vmatpush1.bf16.msra.mxu0 0
    %1755 = vmatprep.subr.bf16.mxu0 0
    %1756 = vmatpush1.bf16.msra.mxu0 0
    %1757 = vmatprep.subr.bf16.mxu0 0
    %1758 = vmatpush1.bf16.msra.mxu0 0
    %1759 = vmatprep.subr.bf16.mxu0 0
    %1760 = vmatpush1.bf16.msra.mxu0 0
    %1761 = vmatprep.subr.bf16.mxu0 0
    %1762 = vmatpush1.bf16.msra.mxu0 0
    %1763 = vmatprep.subr.bf16.mxu0 0
    %1764 = vmatpush1.bf16.msra.mxu0 0
    %1765 = vmatprep.subr.bf16.mxu0 0
    %1766 = vmatpush1.bf16.msra.mxu0 0
    %1767 = vmatprep.subr.bf16.mxu0 0
    %1768 = vmatpush1.bf16.msra.mxu0 0
    %1769 = vmatprep.subr.bf16.mxu0 0
    %1770 = vmatpush1.bf16.msra.mxu0 0
    %1771 = vmatprep.mubr.bf16.mxu0 0
    %1772 = vmatmul.mubr.bf16.gmra.mrb[0].mxu0 %v1368
    %v1773 = vpop.f32.mrb[0].mxu0
    %v1774 = vadd.f32 %v1733, %v1773
    %v1775 = vpop.f32.mrb[0].mxu0
    %v1776 = vpop.f32.mrb[0].mxu0
    %v1777 = vadd.f32 %v1736, %v1776
    %v1778 = vpop.f32.mrb[0].mxu0
    %1779 = vdwg.mxu0
    %v1780 = vmax.f32 %v1774, 0.0
    %v1781 = vmax.f32 %v1777, 0.0
    %1782 = vst [vmem:[#allocation7] sm:$0xff] %v1780
    %1783 = vst [vmem:[#allocation7 + $0x8] sm:$0xff] %v1781
    // Predicated region
    $region22: #{tpu_custom_call.1} parent=1 // pred_check
      _
    $region23: #{tpu_custom_call.1} parent=1 // pred_check_branch
      %1785 = sbr.rel (0) target = $region25
    $region24: #{tpu_custom_call.1} parent=1 // pred_region
      %s1787 = ssub.s32 256, 256
      %1788 = vsyncadd [#allocation4], %s1787
      %s1789 = sshll.u32 [#allocation7], 4
      %s1790 = int_to_ptr.vmem [resolvable:$true] %s1789
      %1795 = dma.vmem_to_hbm [thread:$0]  %s1790, 256, %s3, [#allocation4], 128, 128, 8
    $region25: #{tpu_custom_call.1} parent=1 // pred_fallthru
      _
    // Predicated region
    $region26: #{tpu_custom_call.1} parent=1 // pred_check
      _
    $region27: #{tpu_custom_call.1} parent=1 // pred_check_branch
      %1797 = sbr.rel (0) target = $region29
    $region28: #{tpu_custom_call.1} parent=1 // pred_region
      %1798 = dma.done [#allocation4], 256
    $region29: #{tpu_custom_call.1} parent=1 // pred_fallthru
      _
    %1799 = vsyncpa [#allocation3], 1
    %1800 = vsyncpa [#allocation6], 1
    %1801 = vsyncpa [#allocation4], 1

</llo_original>
